<compile_context>
chip_gen: v7x
topology: tpu7x:2x2x1
jax: 0.10.0
libtpu: 0.0.40
codegen_flags: <defaults>
</compile_context>

<pallas_src>
import math

import jax
import jax.numpy as jnp
import numpy as np
from jax.experimental import pallas as pl
from jax.experimental.pallas import tpu as pltpu

# bf16 MXU inputs for the big att matmul (accumulation stays f32).  Set to
# jnp.float32 for bit-tight agreement with the f32 reference.
MXU_INPUT_DTYPE = jnp.bfloat16


# ----------------------------------------------------------------------------
# Fused Pallas kernel: attention + all SNL units, BB batch elements per step.
# ----------------------------------------------------------------------------
def _make_stage_kernel(T, C, Cp, S, N, BB, RB, mxu_dtype):
    nrb = N // RB
    inv_t = 1.0 / T
    contract0 = (((0,), (0,)), ((), ()))  # contract dim 0 of lhs with dim 0 of rhs

    def kernel(x_ref, wt_ref, wp_ref, wg_ref, w12_ref, o_ref, att_ref):
        # x_ref/o_ref: (BB, T*C, N)      wt/wp: (8pad, C)  zero-padded rows
        # wg: (S, T*Cp, T*C)             w12: (S, T*C, 2*T*Cp)  == [W1 | W2]
        # att_ref: VMEM (N, N) mxu_dtype -- UN-normalized symmetric affinity
        for b in range(BB):
            x_all = x_ref[b]                                   # (T*C, N) f32

            # --- temporal mean BEFORE the 1x1 t/p convs (bias-free => linear)
            x_mean = x_all[0:C, :]
            for t in range(1, T):
                x_mean = x_mean + x_all[t * C:(t + 1) * C, :]
            x_mean = x_mean * jnp.float32(inv_t)               # (C, N)

            tm = jnp.maximum(jnp.dot(wt_ref[...], x_mean,
                                     preferred_element_type=jnp.float32), 0.0)
            pm = jnp.maximum(jnp.dot(wp_ref[...], x_mean,
                                     preferred_element_type=jnp.float32), 0.0)

            # --- symmetric raw affinity, built in RB-row blocks; accumulate
            #     its column sums (== row sums by symmetry) for normalization.
            d_row = jnp.zeros((1, N), jnp.float32)
            for rb in range(nrb):
                lt = tm[:, rb * RB:(rb + 1) * RB]              # (8, RB)
                lp = pm[:, rb * RB:(rb + 1) * RB]              # (8, RB)
                blk = 0.5 * (
                    jax.lax.dot_general(lt, pm, contract0,
                                        preferred_element_type=jnp.float32)
                    + jax.lax.dot_general(lp, tm, contract0,
                                          preferred_element_type=jnp.float32))  # (RB, N)
                d_row = d_row + jnp.sum(blk, axis=0, keepdims=True)
                att_ref[rb * RB:(rb + 1) * RB, :] = blk.astype(att_ref.dtype)

            # degree normalization folded into the matmul operands:
            #   att_norm = diag(s) att_raw diag(s)  =>  ag = ((g*s) @ att_raw) * s
            s_row = jnp.where(d_row != 0.0,
                              jax.lax.rsqrt(jnp.where(d_row != 0.0, d_row, 1.0)),
                              0.0)                             # (1, N) f32

            # --- S residual SNL units; `out` stays in vregs, att stays in VMEM
            out = x_all                                        # (T*C, N) f32
            for u in range(S):
                # g = conv_g(out) for all T frames in one matmul (block-diag wg)
                g = jnp.dot(wg_ref[u], out,
                            preferred_element_type=jnp.float32)          # (T*Cp, N)
                gs = (g * s_row).astype(mxu_dtype)
                # att is symmetric, so right-multiplication == (att @ g) per frame
                ag = jnp.dot(gs, att_ref[...],
                             preferred_element_type=jnp.float32) * s_row  # (T*Cp, N)
                # fused projections: y = [W1 | W2] @ [g ; att g]
                gag = jnp.concatenate([g, ag], axis=0)         # (2*T*Cp, N)
                out = out + jnp.dot(w12_ref[u], gag,
                                    preferred_element_type=jnp.float32)
                # TODO(synk): BatchNorm inside SNLUnit treated as identity.
            o_ref[b] = out

    return kernel


# ----------------------------------------------------------------------------
# Wrapper helpers
# ----------------------------------------------------------------------------
def _pick_bb(B, max_bb=8):
    """Largest divisor of B (<= max_bb) that keeps >= 2 grid steps (megacore)."""
    best = 1
    for bb in range(1, min(B, max_bb) + 1):
        if B % bb == 0 and (B // bb >= 2 or B == 1):
            best = bb
    return best


def _pick_rb(N):
    """Row-block for the affinity build: keep the live (RB,N) f32 block
    <= ~32 vregs (128 KiB), RB multiple of 8 and a divisor of N."""
    cap = min(128, N, max(8, (32768 // max(N, 1)) // 8 * 8))
    rb = cap
    while rb >= 8:
        if N % rb == 0:
            return rb
        rb -= 8
    return N


# ----------------------------------------------------------------------------
# Wrapper
# ----------------------------------------------------------------------------
def stage_forward(x_ncthw, wt, wp, stage_weights, mxu_dtype=MXU_INPUT_DTYPE):
    """x_ncthw: (B, C, T, H, W) f32; wt/wp: (Cp, C); stage_weights: list of
    (wg (Cp, C), w1 (C, Cp), w2 (C, Cp)).  Returns (B, C, T, H, W)."""
    B, C, T, H, W = x_ncthw.shape
    N = H * W
    Cp = wt.shape[0]
    S = len(stage_weights)

    # NCDHW -> (B, T, C, HW): a C<->T axis swap (H*W already contiguous),
    # then merge (T, C) so the kernel sees a lane-dense (T*C, N) tile.
    x_btcn = jnp.transpose(x_ncthw, (0, 2, 1, 3, 4)).reshape(B, T * C, N)

    # Pad the t/p conv weights to 8 output rows (full sublane tile); the extra
    # zero rows contribute nothing through the relu / contraction.
    Cpad = max(8, ((Cp + 7) // 8) * 8)
    wt_p = jnp.zeros((Cpad, C), jnp.float32).at[:Cp].set(wt)
    wp_p = jnp.zeros((Cpad, C), jnp.float32).at[:Cp].set(wp)

    # Fold T into the unit matmuls: block-diagonal kron(I_T, W) weights so each
    # 1x1 conv over all T frames is a single 2-D matmul.  (The kron inflates
    # the K dim by T with zeros -- fine for T=4; use per-frame matmuls if T grows.)
    eye_t = jnp.eye(T, dtype=jnp.float32)
    wg_bd = jnp.stack([jnp.kron(eye_t, wg) for (wg, _, _) in stage_weights])  # (S, T*Cp, T*C)
    w1_bd = jnp.stack([jnp.kron(eye_t, w1) for (_, w1, _) in stage_weights])  # (S, T*C, T*Cp)
    w2_bd = jnp.stack([jnp.kron(eye_t, w2) for (_, _, w2) in stage_weights])  # (S, T*C, T*Cp)
    # Fuse the two per-unit projections: y = [W1 | W2] @ [g ; att g]
    w12_bd = jnp.concatenate([w1_bd, w2_bd], axis=2)                          # (S, T*C, 2*T*Cp)

    BB = _pick_bb(B)
    RB = _pick_rb(N)
    kernel = _make_stage_kernel(T=T, C=C, Cp=Cp, S=S, N=N, BB=BB, RB=RB,
                                mxu_dtype=mxu_dtype)

    # Explicit VMEM budget (bf16 att scratch + double-buffered x/out tiles +
    # weights), with 2x headroom; keeps us honest on v7x's 64 MiB VMEM.
    att_bytes = N * N * jnp.dtype(mxu_dtype).itemsize
    io_bytes = 2 * 2 * BB * T * C * N * 4
    w_bytes = (2 * Cpad * C + S * (T * Cp) * (T * C) + S * (T * C) * (2 * T * Cp)) * 4 * 2
    vmem_limit = int(min(128 << 20, max(32 << 20, 2 * (att_bytes + io_bytes + w_bytes))))

    out = pl.pallas_call(
        kernel,
        out_shape=jax.ShapeDtypeStruct((B, T * C, N), jnp.float32),
        grid=(B // BB,),
        in_specs=[
            pl.BlockSpec((BB, T * C, N), lambda i: (i, 0, 0)),
            # Weight specs use constant index maps -> fetched once, no refetch
            # across grid steps (Buffered(1) intentionally not used; weights
            # are only a few KB here).
            pl.BlockSpec((Cpad, C), lambda i: (0, 0)),
            pl.BlockSpec((Cpad, C), lambda i: (0, 0)),
            pl.BlockSpec((S, T * Cp, T * C), lambda i: (0, 0, 0)),
            pl.BlockSpec((S, T * C, 2 * T * Cp), lambda i: (0, 0, 0)),
        ],
        out_specs=pl.BlockSpec((BB, T * C, N), lambda i: (i, 0, 0)),
        scratch_shapes=[pltpu.VMEM((N, N), mxu_dtype)],
        compiler_params=pltpu.CompilerParams(
            dimension_semantics=("parallel",),
            vmem_limit_bytes=vmem_limit),
    )(x_btcn, wt_p, wp_p, wg_bd, w12_bd)

    # (B, T*C, N) -> (B, C, T, H, W)
    return jnp.transpose(out.reshape(B, T, C, H, W), (0, 2, 1, 3, 4))


# ----------------------------------------------------------------------------
# Pure-JAX reference (sanity check of the kernel semantics)
# ----------------------------------------------------------------------------
def stage_reference(x_ncthw, wt, wp, stage_weights):
    B, C, T, H, W = x_ncthw.shape
    N = H * W
    t = jnp.einsum('bcthw,pc->bpthw', x_ncthw, wt).mean(axis=2)   # (B,Cp,H,W)
    p = jnp.einsum('bcthw,pc->bpthw', x_ncthw, wp).mean(axis=2)
    tm = t.reshape(B, -1, N).transpose(0, 2, 1)                   # (B,N,Cp)
    pm = p.reshape(B, -1, N)                                      # (B,Cp,N)
    att = jnp.einsum('bnc,bcm->bnm', jax.nn.relu(tm), jax.nn.relu(pm))
    att = (att + att.transpose(0, 2, 1)) / 2
    d = att.sum(axis=2)
    d = jnp.where(d != 0, jnp.sqrt(1.0 / jnp.where(d != 0, d, 1.0)), 0.0)
    att = att * d[:, None, :] * d[:, :, None]
    out = x_ncthw
    for (wg, w1, w2) in stage_weights:
        g = jnp.einsum('bcthw,pc->bpthw', out, wg)                # (B,Cp,T,H,W)
        gf = g.reshape(B, -1, T, N).transpose(0, 2, 3, 1)         # (B,T,N,Cp)
        ag = jnp.einsum('bnm,btmp->btnp', att, gf)
        y = (jnp.einsum('btnp,cp->btnc', gf, w1)
             + jnp.einsum('btnp,cp->btnc', ag, w2))
        out = out + jnp.transpose(y, (0, 3, 1, 2)).reshape(B, -1, T, H, W)
    return out


# ----------------------------------------------------------------------------
if __name__ == "__main__":
    # Stage(inplanes=8, planes=4, nl_type='snl', stage_num=2)
    B, Cin, Cp, T, H, W = 2, 8, 4, 4, 16, 16
    stage_num = 2

    key = jax.random.PRNGKey(0)
    key, kx = jax.random.split(key)
    x = jax.random.normal(kx, (B, Cin, T, H, W), dtype=jnp.float32)

    def conv_w(k, fan_in, shape):
        bound = 1.0 / math.sqrt(fan_in)
        return jax.random.uniform(k, shape, jnp.float32, -bound, bound)

    key, kt, kp = jax.random.split(key, 3)
    wt = conv_w(kt, Cin, (Cp, Cin))   # Conv3d(Cin, Cp, 1).weight (Cp, Cin)
    wp = conv_w(kp, Cin, (Cp, Cin))

    stage_weights = []
    for _ in range(stage_num):
        key, kg, k1, k2 = jax.random.split(key, 4)
        stage_weights.append((conv_w(kg, Cin, (Cp, Cin)),   # g : Cin -> Cp
                              conv_w(k1, Cp, (Cin, Cp)),    # w1: Cp  -> Cin
                              conv_w(k2, Cp, (Cin, Cp))))   # w2: Cp  -> Cin

    out = stage_forward(x, wt, wp, stage_weights)
    out = jax.block_until_ready(out)

    ref = jax.block_until_ready(stage_reference(x, wt, wp, stage_weights))
    # bf16 MXU inputs on the att matmul (f32 accumulation) -> ~1e-3 abs error.
    np.testing.assert_allclose(np.asarray(out), np.asarray(ref),
                               rtol=1e-2, atol=1e-2)
    assert out.shape == (B, Cin, T, H, W)
    print("KERNEL_OK")
</pallas_src>

<mosaic_0001>
module attributes {stable_mosaic.version = 11 : i64} {
  func.func @kernel(%arg0: i32, %arg1: memref<1x32x256xf32, #tpu.memory_space<vmem>>, %arg2: memref<8x8xf32, #tpu.memory_space<vmem>>, %arg3: memref<8x8xf32, #tpu.memory_space<vmem>>, %arg4: memref<2x16x32xf32, #tpu.memory_space<vmem>>, %arg5: memref<2x32x32xf32, #tpu.memory_space<vmem>>, %arg6: memref<1x32x256xf32, #tpu.memory_space<vmem>>, %arg7: memref<256x256xbf16, #tpu.memory_space<vmem>>) attributes {dimension_semantics = [#tpu.dimension_semantics<parallel>], iteration_bounds = array<i64: 2>, scalar_prefetch = 0 : i64, scratch_operands = 1 : i64, tpu.core_type = #tpu.core_type<tc>, window_params = [{transform_indices = @transform_0, window_bounds = array<i64: 1, 32, 256>}, {pipeline_mode = #tpu.pipeline_mode<synchronous>, transform_indices = @transform_1, window_bounds = array<i64: 8, 8>}, {pipeline_mode = #tpu.pipeline_mode<synchronous>, transform_indices = @transform_2, window_bounds = array<i64: 8, 8>}, {pipeline_mode = #tpu.pipeline_mode<synchronous>, transform_indices = @transform_3, window_bounds = array<i64: 2, 16, 32>}, {pipeline_mode = #tpu.pipeline_mode<synchronous>, transform_indices = @transform_4, window_bounds = array<i64: 2, 32, 32>}, {transform_indices = @transform_5, window_bounds = array<i64: 1, 32, 256>}]} {
    %c0 = arith.constant 0 : index
    %c0_0 = arith.constant 0 : index
    %c0_1 = arith.constant 0 : index
    %0 = vector.load %arg1[%c0, %c0_0, %c0_1] : memref<1x32x256xf32, #tpu.memory_space<vmem>>, vector<1x32x256xf32>
    %1 = vector.shape_cast %0 : vector<1x32x256xf32> to vector<32x256xf32>
    %2 = vector.extract_strided_slice %1 {offsets = [0, 0], sizes = [8, 256], strides = [1, 1]} : vector<32x256xf32> to vector<8x256xf32>
    %3 = vector.extract_strided_slice %1 {offsets = [8, 0], sizes = [8, 256], strides = [1, 1]} : vector<32x256xf32> to vector<8x256xf32>
    %4 = arith.addf %2, %3 : vector<8x256xf32>
    %5 = vector.extract_strided_slice %1 {offsets = [16, 0], sizes = [8, 256], strides = [1, 1]} : vector<32x256xf32> to vector<8x256xf32>
    %6 = arith.addf %4, %5 : vector<8x256xf32>
    %7 = vector.extract_strided_slice %1 {offsets = [24, 0], sizes = [8, 256], strides = [1, 1]} : vector<32x256xf32> to vector<8x256xf32>
    %8 = arith.addf %6, %7 : vector<8x256xf32>
    %cst = arith.constant 2.500000e-01 : f32
    %9 = vector.broadcast %cst : f32 to vector<8x256xf32>
    %10 = arith.mulf %8, %9 : vector<8x256xf32>
    %c0_2 = arith.constant 0 : index
    %c0_3 = arith.constant 0 : index
    %11 = vector.load %arg2[%c0_2, %c0_3] : memref<8x8xf32, #tpu.memory_space<vmem>>, vector<8x8xf32>
    %cst_4 = arith.constant dense<0.000000e+00> : vector<8x256xf32>
    %12 = tpu.matmul %11, %10, %cst_4 {dimension_numbers = #tpu.dot_dimension_numbers<[1], [0], [0], [1], [0, 0, 1, 1], [], []>} : vector<8x8xf32>, vector<8x256xf32>, vector<8x256xf32> -> vector<8x256xf32>
    %cst_5 = arith.constant 0.000000e+00 : f32
    %13 = vector.broadcast %cst_5 : f32 to vector<8x256xf32>
    %14 = arith.maximumf %12, %13 : vector<8x256xf32>
    %c0_6 = arith.constant 0 : index
    %c0_7 = arith.constant 0 : index
    %15 = vector.load %arg3[%c0_6, %c0_7] : memref<8x8xf32, #tpu.memory_space<vmem>>, vector<8x8xf32>
    %cst_8 = arith.constant dense<0.000000e+00> : vector<8x256xf32>
    %16 = tpu.matmul %15, %10, %cst_8 {dimension_numbers = #tpu.dot_dimension_numbers<[1], [0], [0], [1], [0, 0, 1, 1], [], []>} : vector<8x8xf32>, vector<8x256xf32>, vector<8x256xf32> -> vector<8x256xf32>
    %cst_9 = arith.constant 0.000000e+00 : f32
    %17 = vector.broadcast %cst_9 : f32 to vector<8x256xf32>
    %18 = arith.maximumf %16, %17 : vector<8x256xf32>
    %cst_10 = arith.constant 0.000000e+00 : f32
    %19 = vector.broadcast %cst_10 : f32 to vector<1x256xf32>
    %20 = vector.extract_strided_slice %14 {offsets = [0, 0], sizes = [8, 128], strides = [1, 1]} : vector<8x256xf32> to vector<8x128xf32>
    %21 = vector.extract_strided_slice %18 {offsets = [0, 0], sizes = [8, 128], strides = [1, 1]} : vector<8x256xf32> to vector<8x128xf32>
    %cst_11 = arith.constant dense<0.000000e+00> : vector<128x256xf32>
    %22 = tpu.matmul %20, %18, %cst_11 {dimension_numbers = #tpu.dot_dimension_numbers<[0], [0], [1], [1], [0, 1, 1, 1], [], []>} : vector<8x128xf32>, vector<8x256xf32>, vector<128x256xf32> -> vector<128x256xf32>
    %cst_12 = arith.constant dense<0.000000e+00> : vector<128x256xf32>
    %23 = tpu.matmul %21, %14, %cst_12 {dimension_numbers = #tpu.dot_dimension_numbers<[0], [0], [1], [1], [0, 1, 1, 1], [], []>} : vector<8x128xf32>, vector<8x256xf32>, vector<128x256xf32> -> vector<128x256xf32>
    %24 = arith.addf %22, %23 : vector<128x256xf32>
    %cst_13 = arith.constant 5.000000e-01 : f32
    %25 = vector.broadcast %cst_13 : f32 to vector<128x256xf32>
    %26 = arith.mulf %25, %24 : vector<128x256xf32>
    %cst_14 = arith.constant dense<0.000000e+00> : vector<256xf32>
    %27 = vector.multi_reduction <add>, %26, %cst_14 [0] : vector<128x256xf32> to vector<256xf32>
    %28 = vector.shape_cast %27 : vector<256xf32> to vector<1x256xf32>
    %29 = arith.addf %19, %28 : vector<1x256xf32>
    %30 = arith.truncf %26 : vector<128x256xf32> to vector<128x256xbf16>
    %c0_15 = arith.constant 0 : index
    %c0_16 = arith.constant 0 : index
    %31 = vector.load %arg7[%c0_15, %c0_16] : memref<256x256xbf16, #tpu.memory_space<vmem>>, vector<128x256xbf16>
    tpu.vector_store %arg7[%c0_15, %c0_16], %30 {strides = array<i32>} : memref<256x256xbf16, #tpu.memory_space<vmem>>, vector<128x256xbf16>,
    %32 = vector.extract_strided_slice %14 {offsets = [0, 128], sizes = [8, 128], strides = [1, 1]} : vector<8x256xf32> to vector<8x128xf32>
    %33 = vector.extract_strided_slice %18 {offsets = [0, 128], sizes = [8, 128], strides = [1, 1]} : vector<8x256xf32> to vector<8x128xf32>
    %cst_17 = arith.constant dense<0.000000e+00> : vector<128x256xf32>
    %34 = tpu.matmul %32, %18, %cst_17 {dimension_numbers = #tpu.dot_dimension_numbers<[0], [0], [1], [1], [0, 1, 1, 1], [], []>} : vector<8x128xf32>, vector<8x256xf32>, vector<128x256xf32> -> vector<128x256xf32>
    %cst_18 = arith.constant dense<0.000000e+00> : vector<128x256xf32>
    %35 = tpu.matmul %33, %14, %cst_18 {dimension_numbers = #tpu.dot_dimension_numbers<[0], [0], [1], [1], [0, 1, 1, 1], [], []>} : vector<8x128xf32>, vector<8x256xf32>, vector<128x256xf32> -> vector<128x256xf32>
    %36 = arith.addf %34, %35 : vector<128x256xf32>
    %cst_19 = arith.constant 5.000000e-01 : f32
    %37 = vector.broadcast %cst_19 : f32 to vector<128x256xf32>
    %38 = arith.mulf %37, %36 : vector<128x256xf32>
    %cst_20 = arith.constant dense<0.000000e+00> : vector<256xf32>
    %39 = vector.multi_reduction <add>, %38, %cst_20 [0] : vector<128x256xf32> to vector<256xf32>
    %40 = vector.shape_cast %39 : vector<256xf32> to vector<1x256xf32>
    %41 = arith.addf %29, %40 : vector<1x256xf32>
    %42 = arith.truncf %38 : vector<128x256xf32> to vector<128x256xbf16>
    %c128 = arith.constant 128 : index
    %c0_21 = arith.constant 0 : index
    %43 = vector.load %arg7[%c128, %c0_21] : memref<256x256xbf16, #tpu.memory_space<vmem>>, vector<128x256xbf16>
    tpu.vector_store %arg7[%c128, %c0_21], %42 {strides = array<i32>} : memref<256x256xbf16, #tpu.memory_space<vmem>>, vector<128x256xbf16>,
    %cst_22 = arith.constant 0.000000e+00 : f32
    %44 = vector.broadcast %cst_22 : f32 to vector<1x256xf32>
    %45 = arith.cmpf one, %41, %44 : vector<1x256xf32>
    %cst_23 = arith.constant 0.000000e+00 : f32
    %46 = vector.broadcast %cst_23 : f32 to vector<1x256xf32>
    %47 = arith.cmpf one, %41, %46 : vector<1x256xf32>
    %cst_24 = arith.constant 1.000000e+00 : f32
    %48 = vector.broadcast %cst_24 : f32 to vector<1x256xf32>
    %49 = arith.select %47, %41, %48 : vector<1x256xi1>, vector<1x256xf32>
    %50 = math.rsqrt %49 : vector<1x256xf32>
    %cst_25 = arith.constant 0.000000e+00 : f32
    %51 = vector.broadcast %cst_25 : f32 to vector<1x256xf32>
    %52 = arith.select %45, %50, %51 : vector<1x256xi1>, vector<1x256xf32>
    %c0_26 = arith.constant 0 : index
    %c0_27 = arith.constant 0 : index
    %c0_28 = arith.constant 0 : index
    %53 = vector.load %arg4[%c0_26, %c0_27, %c0_28] : memref<2x16x32xf32, #tpu.memory_space<vmem>>, vector<1x16x32xf32>
    %54 = vector.shape_cast %53 : vector<1x16x32xf32> to vector<16x32xf32>
    %cst_29 = arith.constant dense<0.000000e+00> : vector<16x256xf32>
    %55 = tpu.matmul %54, %1, %cst_29 {dimension_numbers = #tpu.dot_dimension_numbers<[1], [0], [0], [1], [0, 0, 1, 1], [], []>} : vector<16x32xf32>, vector<32x256xf32>, vector<16x256xf32> -> vector<16x256xf32>
    %56 = vector.broadcast %52 : vector<1x256xf32> to vector<16x256xf32>
    %57 = arith.mulf %55, %56 : vector<16x256xf32>
    %58 = arith.truncf %57 : vector<16x256xf32> to vector<16x256xbf16>
    %c0_30 = arith.constant 0 : index
    %c0_31 = arith.constant 0 : index
    %59 = vector.load %arg7[%c0_30, %c0_31] : memref<256x256xbf16, #tpu.memory_space<vmem>>, vector<256x256xbf16>
    %cst_32 = arith.constant dense<0.000000e+00> : vector<16x256xf32>
    %60 = tpu.matmul %58, %59, %cst_32 {dimension_numbers = #tpu.dot_dimension_numbers<[1], [0], [0], [1], [0, 0, 1, 1], [], []>} : vector<16x256xbf16>, vector<256x256xbf16>, vector<16x256xf32> -> vector<16x256xf32>
    %61 = vector.broadcast %52 : vector<1x256xf32> to vector<16x256xf32>
    %62 = arith.mulf %60, %61 : vector<16x256xf32>
    %63 = tpu.concatenate %55, %62 in 0 : vector<16x256xf32>, vector<16x256xf32> -> vector<32x256xf32>
    %c0_33 = arith.constant 0 : index
    %c0_34 = arith.constant 0 : index
    %c0_35 = arith.constant 0 : index
    %64 = vector.load %arg5[%c0_33, %c0_34, %c0_35] : memref<2x32x32xf32, #tpu.memory_space<vmem>>, vector<1x32x32xf32>
    %65 = vector.shape_cast %64 : vector<1x32x32xf32> to vector<32x32xf32>
    %cst_36 = arith.constant dense<0.000000e+00> : vector<32x256xf32>
    %66 = tpu.matmul %65, %63, %cst_36 {dimension_numbers = #tpu.dot_dimension_numbers<[1], [0], [0], [1], [0, 0, 1, 1], [], []>} : vector<32x32xf32>, vector<32x256xf32>, vector<32x256xf32> -> vector<32x256xf32>
    %67 = arith.addf %1, %66 : vector<32x256xf32>
    %c1 = arith.constant 1 : index
    %c0_37 = arith.constant 0 : index
    %c0_38 = arith.constant 0 : index
    %68 = vector.load %arg4[%c1, %c0_37, %c0_38] : memref<2x16x32xf32, #tpu.memory_space<vmem>>, vector<1x16x32xf32>
    %69 = vector.shape_cast %68 : vector<1x16x32xf32> to vector<16x32xf32>
    %cst_39 = arith.constant dense<0.000000e+00> : vector<16x256xf32>
    %70 = tpu.matmul %69, %67, %cst_39 {dimension_numbers = #tpu.dot_dimension_numbers<[1], [0], [0], [1], [0, 0, 1, 1], [], []>} : vector<16x32xf32>, vector<32x256xf32>, vector<16x256xf32> -> vector<16x256xf32>
    %71 = vector.broadcast %52 : vector<1x256xf32> to vector<16x256xf32>
    %72 = arith.mulf %70, %71 : vector<16x256xf32>
    %73 = arith.truncf %72 : vector<16x256xf32> to vector<16x256xbf16>
    %c0_40 = arith.constant 0 : index
    %c0_41 = arith.constant 0 : index
    %74 = vector.load %arg7[%c0_40, %c0_41] : memref<256x256xbf16, #tpu.memory_space<vmem>>, vector<256x256xbf16>
    %cst_42 = arith.constant dense<0.000000e+00> : vector<16x256xf32>
    %75 = tpu.matmul %73, %74, %cst_42 {dimension_numbers = #tpu.dot_dimension_numbers<[1], [0], [0], [1], [0, 0, 1, 1], [], []>} : vector<16x256xbf16>, vector<256x256xbf16>, vector<16x256xf32> -> vector<16x256xf32>
    %76 = vector.broadcast %52 : vector<1x256xf32> to vector<16x256xf32>
    %77 = arith.mulf %75, %76 : vector<16x256xf32>
    %78 = tpu.concatenate %70, %77 in 0 : vector<16x256xf32>, vector<16x256xf32> -> vector<32x256xf32>
    %c1_43 = arith.constant 1 : index
    %c0_44 = arith.constant 0 : index
    %c0_45 = arith.constant 0 : index
    %79 = vector.load %arg5[%c1_43, %c0_44, %c0_45] : memref<2x32x32xf32, #tpu.memory_space<vmem>>, vector<1x32x32xf32>
    %80 = vector.shape_cast %79 : vector<1x32x32xf32> to vector<32x32xf32>
    %cst_46 = arith.constant dense<0.000000e+00> : vector<32x256xf32>
    %81 = tpu.matmul %80, %78, %cst_46 {dimension_numbers = #tpu.dot_dimension_numbers<[1], [0], [0], [1], [0, 0, 1, 1], [], []>} : vector<32x32xf32>, vector<32x256xf32>, vector<32x256xf32> -> vector<32x256xf32>
    %82 = arith.addf %67, %81 : vector<32x256xf32>
    %c0_47 = arith.constant 0 : index
    %c0_48 = arith.constant 0 : index
    %c0_49 = arith.constant 0 : index
    %83 = vector.load %arg6[%c0_47, %c0_48, %c0_49] : memref<1x32x256xf32, #tpu.memory_space<vmem>>, vector<1x32x256xf32>
    %84 = vector.shape_cast %83 : vector<1x32x256xf32> to vector<32x256xf32>
    %85 = vector.shape_cast %82 : vector<32x256xf32> to vector<1x32x256xf32>
    tpu.vector_store %arg6[%c0_47, %c0_48, %c0_49], %85 {strides = array<i32>} : memref<1x32x256xf32, #tpu.memory_space<vmem>>, vector<1x32x256xf32>,
    return
  }
  func.func @transform_0(%arg0: i32) -> (i32, i32, i32) {
    %c0_i32 = arith.constant 0 : i32
    %c0_i32_0 = arith.constant 0 : i32
    %c0_i32_1 = arith.constant 0 : i32
    return %arg0, %c0_i32, %c0_i32_0 : i32, i32, i32
  }
  func.func @transform_1(%arg0: i32) -> (i32, i32) {
    %c0_i32 = arith.constant 0 : i32
    %c0_i32_0 = arith.constant 0 : i32
    %c0_i32_1 = arith.constant 0 : i32
    return %c0_i32, %c0_i32_0 : i32, i32
  }
  func.func @transform_2(%arg0: i32) -> (i32, i32) {
    %c0_i32 = arith.constant 0 : i32
    %c0_i32_0 = arith.constant 0 : i32
    %c0_i32_1 = arith.constant 0 : i32
    return %c0_i32, %c0_i32_0 : i32, i32
  }
  func.func @transform_3(%arg0: i32) -> (i32, i32, i32) {
    %c0_i32 = arith.constant 0 : i32
    %c0_i32_0 = arith.constant 0 : i32
    %c0_i32_1 = arith.constant 0 : i32
    %c0_i32_2 = arith.constant 0 : i32
    return %c0_i32, %c0_i32_0, %c0_i32_1 : i32, i32, i32
  }
  func.func @transform_4(%arg0: i32) -> (i32, i32, i32) {
    %c0_i32 = arith.constant 0 : i32
    %c0_i32_0 = arith.constant 0 : i32
    %c0_i32_1 = arith.constant 0 : i32
    %c0_i32_2 = arith.constant 0 : i32
    return %c0_i32, %c0_i32_0, %c0_i32_1 : i32, i32, i32
  }
  func.func @transform_5(%arg0: i32) -> (i32, i32, i32) {
    %c0_i32 = arith.constant 0 : i32
    %c0_i32_0 = arith.constant 0 : i32
    %c0_i32_1 = arith.constant 0 : i32
    return %arg0, %c0_i32, %c0_i32_0 : i32, i32, i32
  }
}

</mosaic_0001>

<llo_original>
// kernel: tpu_custom_call.1
$region0: #{tpu_custom_call.1}
  #allocation0 [shape = 'u32[]', space=smem, size = 0x4, offset = 0x4, fixed_abs, tag = 'smem constant byte address 0x4 - core index']
  #allocation1 [shape = 'u32[144,128]{1,0:T(1,128)}', space=vmem, size = 0x12000, scoped, tag = 'internal scratch']
  #allocation2 [shape = 'bf16[256,256]{1,0:T(16,128)(2,1)}', space=vmem, size = 0x20000, scoped, tag = 'scratch operand']
  %s0 = inlined_call_operand.hbm [shape: f32[2,32,256], index: 0, kind: input, shape index: {}]
  %s1 = inlined_call_operand.hbm [shape: f32[8,8], index: 1, kind: input, shape index: {}]
  %s2 = inlined_call_operand.hbm [shape: f32[8,8], index: 2, kind: input, shape index: {}]
  %s3 = inlined_call_operand.hbm [shape: f32[2,16,32], index: 3, kind: input, shape index: {}]
  %s4 = inlined_call_operand.hbm [shape: f32[2,32,32], index: 4, kind: input, shape index: {}]
  %s5 = inlined_call_operand.hbm [shape: f32[2,32,256], index: 5, kind: output, shape index: {}]
  %s6 = sld [smem:[#allocation0]]
  $region73: #{tpu_custom_call.1} parent=0
    _
  %s8 = ssub.s32 1, %s6
  %s9 = scalar_select 0, %s8, %s6
  $region1: #{tpu_custom_call.1} parent=0
    #allocation3 [shape = 'u8[65536]{0}', space=vmem, size = 0x10000, scoped, tag = 'input window, operand 0']
    #allocation4 [shape = 's32[2]{0}', space=sflag, size = 0x8, scoped, tag = 'scoped memory for tpu_custom_call.1']
    #allocation5 [shape = 's32[2]{0}', space=sflag, size = 0x8, scoped, tag = 'scoped memory for tpu_custom_call.1']
    #allocation6 [shape = 'u8[4096]{0}', space=vmem, size = 0x1000, scoped, tag = 'input window, operand 1, single buffered']
    #allocation7 [shape = 's32[1]{0}', space=sflag, size = 0x4, scoped, tag = 'scoped memory for tpu_custom_call.1']
    #allocation8 [shape = 'u8[4096]{0}', space=vmem, size = 0x1000, scoped, tag = 'input window, operand 2, single buffered']
    #allocation9 [shape = 'u8[16384]{0}', space=vmem, size = 0x4000, scoped, tag = 'input window, operand 3, single buffered']
    #allocation10 [shape = 's32[1]{0}', space=sflag, size = 0x4, scoped, tag = 'scoped memory for tpu_custom_call.1']
    #allocation11 [shape = 'u8[32768]{0}', space=vmem, size = 0x8000, scoped, tag = 'input window, operand 4, single buffered']
    #allocation12 [shape = 'u8[65536]{0}', space=vmem, size = 0x10000, scoped, tag = 'output window, operand 0']
    %10 = vsyncpa [#allocation4], 0
    %s11 = scalar_lea.sflag [#allocation4], 1
    %12 = vsyncpa %s11, 0
    %13 = vsyncpa [#allocation7], 0
    %14 = vsyncpa [#allocation10], 0
    %15 = vsyncpa [#allocation5], 0
    %s16 = scalar_lea.sflag [#allocation5], 1
    %17 = vsyncpa %s16, 0
    loop: start=0, step=1, limit=4
    $region2: #{tpu_custom_call.1} parent=1 // loop_pre_header
      _
    $region3: #{tpu_custom_call.1} parent=1 // loop_header
      %s19 = sphi 0, %s23
      %p20 = scmp.ge.s32.totalorder %s19, 4
      %s29 = sphi 0, %s31
      %s32 = sphi 0, %s29
      %s33 = sphi 0, %s32
      %s49 = sphi 0, %s33
      %s53 = sphi 0, %s53
      %s55 = sphi 0, %s53
      %s56 = sphi 0, %s55
      %s70 = sphi 0, %s56
      %s74 = sphi 0, %s74
      %s76 = sphi 0, %s74
      %s77 = sphi 0, %s76
      %s91 = sphi 0, %s77
      %s95 = sphi 0, %s95
      %s97 = sphi 0, %s95
      %s98 = sphi 0, %s97
      %s112 = sphi 0, %s98
      %s116 = sphi 0, %s116
      %s118 = sphi 0, %s116
      %s119 = sphi 0, %s118
      %s133 = sphi 0, %s119
      %s139 = sphi 0, %s141
      %s142 = sphi 0, %s139
      %s143 = sphi 0, %s142
      %s159 = sphi 0, %s143
    $region4: #{tpu_custom_call.1} parent=1 // loop_header_branch
      %22 = sbr.rel (%p20) target = $region8
    $region5: #{tpu_custom_call.1} parent=1 // loop_body
      %s24 = ssub.s32 %s19, 1
      %s25 = ssub.s32 %s19, 2
      %s26 = sadd.s32 %s19, 1
      %s27 = ssub.s32 %s19, %s26
      %p28 = scmp.eq.s32.totalorder %s27, 0
      %s30 = sadd.s32 %s29, 1
      %s31 = scalar_select %p28, %s29, %s30
      %p34 = pneg %p28
      %p35 = scmp.eq.s32.totalorder %s19, 1
      %p36 = por %p34, %p35
      %p37 = scmp.ne.s32.totalorder %s29, %s32
      %p38 = scmp.eq.s32.totalorder %s19, 0
      %p39 = por %p37, %p38
      %p40 = scmp.ne.s32.totalorder %s29, %s32
      %p41 = scmp.eq.s32.totalorder %s24, 1
      %p42 = por %p40, %p41
      %p43 = scmp.ne.s32.totalorder %s32, %s33
      %p44 = scmp.eq.s32.totalorder %s24, 0
      %p45 = por %p43, %p44
      %p46 = scmp.ne.s32.totalorder %s32, %s33
      %p47 = scmp.eq.s32.totalorder %s25, 1
      %p48 = por %p46, %p47
      %p50 = scmp.ne.s32.totalorder %s33, %s49
      %p51 = scmp.eq.s32.totalorder %s25, 0
      %p52 = por %p50, %p51
      %s54 = sadd.s32 %s53, 1
      %p57 = scmp.eq.s32.totalorder %s19, 1
      %p58 = scmp.ne.s32.totalorder %s53, %s55
      %p59 = scmp.eq.s32.totalorder %s19, 0
      %p60 = por %p58, %p59
      %p61 = scmp.ne.s32.totalorder %s53, %s55
      %p62 = scmp.eq.s32.totalorder %s24, 1
      %p63 = por %p61, %p62
      %p64 = scmp.ne.s32.totalorder %s55, %s56
      %p65 = scmp.eq.s32.totalorder %s24, 0
      %p66 = por %p64, %p65
      %p67 = scmp.ne.s32.totalorder %s55, %s56
      %p68 = scmp.eq.s32.totalorder %s25, 1
      %p69 = por %p67, %p68
      %p71 = scmp.ne.s32.totalorder %s56, %s70
      %p72 = scmp.eq.s32.totalorder %s25, 0
      %p73 = por %p71, %p72
      %s75 = sadd.s32 %s74, 1
      %p78 = scmp.eq.s32.totalorder %s19, 1
      %p79 = scmp.ne.s32.totalorder %s74, %s76
      %p80 = scmp.eq.s32.totalorder %s19, 0
      %p81 = por %p79, %p80
      %p82 = scmp.ne.s32.totalorder %s74, %s76
      %p83 = scmp.eq.s32.totalorder %s24, 1
      %p84 = por %p82, %p83
      %p85 = scmp.ne.s32.totalorder %s76, %s77
      %p86 = scmp.eq.s32.totalorder %s24, 0
      %p87 = por %p85, %p86
      %p88 = scmp.ne.s32.totalorder %s76, %s77
      %p89 = scmp.eq.s32.totalorder %s25, 1
      %p90 = por %p88, %p89
      %p92 = scmp.ne.s32.totalorder %s77, %s91
      %p93 = scmp.eq.s32.totalorder %s25, 0
      %p94 = por %p92, %p93
      %s96 = sadd.s32 %s95, 1
      %p99 = scmp.eq.s32.totalorder %s19, 1
      %p100 = scmp.ne.s32.totalorder %s95, %s97
      %p101 = scmp.eq.s32.totalorder %s19, 0
      %p102 = por %p100, %p101
      %p103 = scmp.ne.s32.totalorder %s95, %s97
      %p104 = scmp.eq.s32.totalorder %s24, 1
      %p105 = por %p103, %p104
      %p106 = scmp.ne.s32.totalorder %s97, %s98
      %p107 = scmp.eq.s32.totalorder %s24, 0
      %p108 = por %p106, %p107
      %p109 = scmp.ne.s32.totalorder %s97, %s98
      %p110 = scmp.eq.s32.totalorder %s25, 1
      %p111 = por %p109, %p110
      %p113 = scmp.ne.s32.totalorder %s98, %s112
      %p114 = scmp.eq.s32.totalorder %s25, 0
      %p115 = por %p113, %p114
      %s117 = sadd.s32 %s116, 1
      %p120 = scmp.eq.s32.totalorder %s19, 1
      %p121 = scmp.ne.s32.totalorder %s116, %s118
      %p122 = scmp.eq.s32.totalorder %s19, 0
      %p123 = por %p121, %p122
      %p124 = scmp.ne.s32.totalorder %s116, %s118
      %p125 = scmp.eq.s32.totalorder %s24, 1
      %p126 = por %p124, %p125
      %p127 = scmp.ne.s32.totalorder %s118, %s119
      %p128 = scmp.eq.s32.totalorder %s24, 0
      %p129 = por %p127, %p128
      %p130 = scmp.ne.s32.totalorder %s118, %s119
      %p131 = scmp.eq.s32.totalorder %s25, 1
      %p132 = por %p130, %p131
      %p134 = scmp.ne.s32.totalorder %s119, %s133
      %p135 = scmp.eq.s32.totalorder %s25, 0
      %p136 = por %p134, %p135
      %s137 = ssub.s32 %s19, %s26
      %p138 = scmp.eq.s32.totalorder %s137, 0
      %s140 = sadd.s32 %s139, 1
      %s141 = scalar_select %p138, %s139, %s140
      %p144 = pneg %p138
      %p145 = scmp.eq.s32.totalorder %s19, 1
      %p146 = por %p144, %p145
      %p147 = scmp.ne.s32.totalorder %s139, %s142
      %p148 = scmp.eq.s32.totalorder %s19, 0
      %p149 = por %p147, %p148
      %p150 = scmp.ne.s32.totalorder %s139, %s142
      %p151 = scmp.eq.s32.totalorder %s24, 1
      %p152 = por %p150, %p151
      %p153 = scmp.ne.s32.totalorder %s142, %s143
      %p154 = scmp.eq.s32.totalorder %s24, 0
      %p155 = por %p153, %p154
      %p156 = scmp.ne.s32.totalorder %s142, %s143
      %p157 = scmp.eq.s32.totalorder %s25, 1
      %p158 = por %p156, %p157
      %p160 = scmp.ne.s32.totalorder %s143, %s159
      %p161 = scmp.eq.s32.totalorder %s25, 0
      %p162 = por %p160, %p161
      %p163 = scmp.le.s32.totalorder 1, %s19
      %p164 = scmp.lt.s32.totalorder %s19, 3
      %p165 = pnand %p163, %p164
      %p166 = pneg %p165
      // Predicated region
      $region9: #{tpu_custom_call.1} parent=5 // pred_check
        _
      $region10: #{tpu_custom_call.1} parent=5 // pred_check_branch
        %168 = sbr.rel (%p165) target = $region12
      $region11: #{tpu_custom_call.1} parent=5 // pred_region
        %s169 = ssub.s32 %s19, 1
        // Predicated region
        $region13: #{tpu_custom_call.1} parent=11 // pred_check
          %p170 = pneg %p66
        $region14: #{tpu_custom_call.1} parent=11 // pred_check_branch
          %172 = sbr.rel (%p170) target = $region16
        $region15: #{tpu_custom_call.1} parent=11 // pred_region
          %s174 = ssub.s32 128, 128
          %175 = vsyncadd [#allocation7], %s174
          %s177 = sshll.u32 [#allocation6], 4
          %s178 = int_to_ptr.vmem [resolvable:$true] %s177
          %180 = dma.hbm_to_vmem [thread:$0]  %s1, 128, %s178, [#allocation7]
        $region16: #{tpu_custom_call.1} parent=11 // pred_fallthru
          _
        // Predicated region
        $region17: #{tpu_custom_call.1} parent=11 // pred_check
          %p181 = pneg %p87
        $region18: #{tpu_custom_call.1} parent=11 // pred_check_branch
          %183 = sbr.rel (%p181) target = $region20
        $region19: #{tpu_custom_call.1} parent=11 // pred_region
          %s185 = ssub.s32 128, 128
          %186 = vsyncadd [#allocation7], %s185
          %s188 = sshll.u32 [#allocation8], 4
          %s189 = int_to_ptr.vmem [resolvable:$true] %s188
          %191 = dma.hbm_to_vmem [thread:$0]  %s2, 128, %s189, [#allocation7]
        $region20: #{tpu_custom_call.1} parent=11 // pred_fallthru
          _
        // Predicated region
        $region21: #{tpu_custom_call.1} parent=11 // pred_check
          %p192 = pneg %p108
        $region22: #{tpu_custom_call.1} parent=11 // pred_check_branch
          %194 = sbr.rel (%p192) target = $region24
        $region23: #{tpu_custom_call.1} parent=11 // pred_region
          %s196 = ssub.s32 512, 512
          %197 = vsyncadd [#allocation10], %s196
          %s198 = sshll.u32 [#allocation9], 4
          %s199 = int_to_ptr.vmem [resolvable:$true] %s198
          %204 = dma.hbm_to_vmem [thread:$0]  %s3, 512, %s199, [#allocation10], 128, 128, 8
        $region24: #{tpu_custom_call.1} parent=11 // pred_fallthru
          _
        // Predicated region
        $region25: #{tpu_custom_call.1} parent=11 // pred_check
          %p205 = pneg %p129
        $region26: #{tpu_custom_call.1} parent=11 // pred_check_branch
          %207 = sbr.rel (%p205) target = $region28
        $region27: #{tpu_custom_call.1} parent=11 // pred_region
          %s209 = ssub.s32 1024, 1024
          %210 = vsyncadd [#allocation10], %s209
          %s211 = sshll.u32 [#allocation11], 4
          %s212 = int_to_ptr.vmem [resolvable:$true] %s211
          %217 = dma.hbm_to_vmem [thread:$0]  %s4, 1024, %s212, [#allocation10], 128, 128, 8
        $region28: #{tpu_custom_call.1} parent=11 // pred_fallthru
          _
      $region12: #{tpu_custom_call.1} parent=5 // pred_fallthru
        _
      %p218 = scmp.lt.s32.totalorder %s19, 2
      // Predicated region
      $region29: #{tpu_custom_call.1} parent=5 // pred_check
        %p219 = pneg %p218
      $region30: #{tpu_custom_call.1} parent=5 // pred_check_branch
        %221 = sbr.rel (%p219) target = $region32
      $region31: #{tpu_custom_call.1} parent=5 // pred_region
        // Predicated region
        $region33: #{tpu_custom_call.1} parent=31 // pred_check
          %p222 = pneg %p39
        $region34: #{tpu_custom_call.1} parent=31 // pred_check_branch
          %224 = sbr.rel (%p222) target = $region36
        $region35: #{tpu_custom_call.1} parent=31 // pred_region
          %s225 = sand.u32 %s29, 1
          %s226 = scalar_lea.sflag [#allocation4], %s225
          %s227 = sand.u32 %s29, 1
          %s228 = smul.addr %s227, 64
          %s229 = scalar_lea.vmem [#allocation3], %s228
          %s231 = ssub.s32 1024, 1024
          %232 = vsyncadd %s226, %s231
          %s233 = smul.addr %s19, 8
          %s234 = smul.addr %s233, 128
          %s235 = scalar_lea.hbm %s0, %s234
          %s236 = sshll.u32 %s229, 4
          %s237 = int_to_ptr.vmem [resolvable:$true] %s236
          %242 = dma.hbm_to_vmem [thread:$0]  %s235, 1024, %s237, %s226, 256, 256, 16
        $region36: #{tpu_custom_call.1} parent=31 // pred_fallthru
          _
      $region32: #{tpu_custom_call.1} parent=5 // pred_fallthru
        _
      %p243 = scmp.le.s32.totalorder 1, %s19
      %p244 = scmp.lt.s32.totalorder %s19, 3
      %p245 = pnand %p243, %p244
      %p246 = pneg %p245
      // Predicated region
      $region37: #{tpu_custom_call.1} parent=5 // pred_check
        _
      $region38: #{tpu_custom_call.1} parent=5 // pred_check_branch
        %248 = sbr.rel (%p245) target = $region40
      $region39: #{tpu_custom_call.1} parent=5 // pred_region
        %s249 = ssub.s32 %s19, 1
        %s250 = sand.u32 %s32, 1
        %s251 = scalar_lea.sflag [#allocation4], %s250
        %s252 = sand.u32 %s32, 1
        %s253 = smul.addr %s252, 64
        %s254 = scalar_lea.vmem [#allocation3], %s253
        // Predicated region
        $region41: #{tpu_custom_call.1} parent=39 // pred_check
          %p255 = pneg %p45
        $region42: #{tpu_custom_call.1} parent=39 // pred_check_branch
          %257 = sbr.rel (%p255) target = $region44
        $region43: #{tpu_custom_call.1} parent=39 // pred_region
          %258 = dma.done %s251, 1024
        $region44: #{tpu_custom_call.1} parent=39 // pred_fallthru
          _
        // Predicated region
        $region45: #{tpu_custom_call.1} parent=39 // pred_check
          %p259 = pneg %p66
        $region46: #{tpu_custom_call.1} parent=39 // pred_check_branch
          %261 = sbr.rel (%p259) target = $region48
        $region47: #{tpu_custom_call.1} parent=39 // pred_region
          %262 = dma.done [#allocation7], 128
        $region48: #{tpu_custom_call.1} parent=39 // pred_fallthru
          _
        // Predicated region
        $region49: #{tpu_custom_call.1} parent=39 // pred_check
          %p263 = pneg %p87
        $region50: #{tpu_custom_call.1} parent=39 // pred_check_branch
          %265 = sbr.rel (%p263) target = $region52
        $region51: #{tpu_custom_call.1} parent=39 // pred_region
          %266 = dma.done [#allocation7], 128
        $region52: #{tpu_custom_call.1} parent=39 // pred_fallthru
          _
        // Predicated region
        $region53: #{tpu_custom_call.1} parent=39 // pred_check
          %p267 = pneg %p108
        $region54: #{tpu_custom_call.1} parent=39 // pred_check_branch
          %269 = sbr.rel (%p267) target = $region56
        $region55: #{tpu_custom_call.1} parent=39 // pred_region
          %270 = dma.done [#allocation10], 512
        $region56: #{tpu_custom_call.1} parent=39 // pred_fallthru
          _
        // Predicated region
        $region57: #{tpu_custom_call.1} parent=39 // pred_check
          %p271 = pneg %p129
        $region58: #{tpu_custom_call.1} parent=39 // pred_check_branch
          %273 = sbr.rel (%p271) target = $region60
        $region59: #{tpu_custom_call.1} parent=39 // pred_region
          %274 = dma.done [#allocation10], 1024
        $region60: #{tpu_custom_call.1} parent=39 // pred_fallthru
          _
        %s275 = sand.u32 %s32, 1
        %s276 = scalar_lea.sflag [#allocation4], %s275
        %s277 = sand.u32 %s32, 1
        %s278 = smul.addr %s277, 64
        %s279 = scalar_lea.vmem [#allocation3], %s278
        %p280 = pneg %p45
        %p281 = pneg %p42
        %p282 = pneg %p66
        %p283 = pneg %p63
        %p284 = pneg %p87
        %p285 = pneg %p84
        %p286 = pneg %p108
        %p287 = pneg %p105
        %p288 = pneg %p129
        %p289 = pneg %p126
        %p290 = pneg %p155
        %p291 = pneg %p152
        %s292 = sand.u32 %s142, 1
        %s293 = scalar_lea.sflag [#allocation5], %s292
        %s294 = sand.u32 %s142, 1
        %s295 = smul.addr %s294, 64
        %s296 = scalar_lea.vmem [#allocation12], %s295
        %v297 = vld [vmem:[%s254] sm:$0xff]
        %v298 = vld [vmem:[%s254 + $0x8] sm:$0xff]
        %v299 = vld [vmem:[%s254 + $0x10] sm:$0xff]
        %v300 = vld [vmem:[%s254 + $0x18] sm:$0xff]
        %v301 = vld [vmem:[%s254 + $0x20] sm:$0xff]
        %v302 = vld [vmem:[%s254 + $0x28] sm:$0xff]
        %v303 = vld [vmem:[%s254 + $0x30] sm:$0xff]
        %v304 = vld [vmem:[%s254 + $0x38] sm:$0xff]
        %v305 = vadd.f32 %v297, %v299
        %v306 = vadd.f32 %v298, %v300
        %v307 = vadd.f32 %v305, %v301
        %v308 = vadd.f32 %v306, %v302
        %v309 = vadd.f32 %v307, %v303
        %v310 = vadd.f32 %v308, %v304
        %v311 = vmul.f32 %v309, 0.25
        %v312 = vmul.f32 %v310, 0.25
        %v313 = vld [vmem:[#allocation6] sm:$0xff]
        %vm314 = vcmask 64512
        %v316 = vsel %vm314, %v313, 0
        %318 = vmatprep.subr.mxu0 %v312
        %319 = vmatpush1.msra.mxu0 %v311
        %320 = vmatprep.subr.mxu0 0.0
        %321 = vmatpush1.msra.mxu0 0.0
        %322 = vmatprep.subr.mxu0 0.0
        %323 = vmatpush1.msra.mxu0 0.0
        %324 = vmatprep.subr.mxu0 0.0
        %325 = vmatpush1.msra.mxu0 0.0
        %326 = vmatprep.subr.mxu0 0.0
        %327 = vmatpush1.msra.mxu0 0.0
        %328 = vmatprep.subr.mxu0 0.0
        %329 = vmatpush1.msra.mxu0 0.0
        %330 = vmatprep.subr.mxu0 0.0
        %331 = vmatpush1.msra.mxu0 0.0
        %332 = vmatprep.subr.mxu0 0.0
        %333 = vmatpush1.msra.mxu0 0.0
        %334 = vmatprep.subr.mxu0 0.0
        %335 = vmatpush1.msra.mxu0 0.0
        %336 = vmatprep.subr.mxu0 0.0
        %337 = vmatpush1.msra.mxu0 0.0
        %338 = vmatprep.subr.mxu0 0.0
        %339 = vmatpush1.msra.mxu0 0.0
        %340 = vmatprep.subr.mxu0 0.0
        %341 = vmatpush1.msra.mxu0 0.0
        %342 = vmatprep.subr.mxu0 0.0
        %343 = vmatpush1.msra.mxu0 0.0
        %344 = vmatprep.subr.mxu0 0.0
        %345 = vmatpush1.msra.mxu0 0.0
        %346 = vmatprep.subr.mxu0 0.0
        %347 = vmatpush1.msra.mxu0 0.0
        %348 = vmatprep.subr.mxu0 0.0
        %349 = vmatpush1.msra.mxu0 0.0
        %350 = vmatprep.subr.mxu0 0.0
        %351 = vmatpush1.msra.mxu0 0.0
        %352 = vmatprep.subr.mxu0 0.0
        %353 = vmatpush1.msra.mxu0 0.0
        %354 = vmatprep.subr.mxu0 0.0
        %355 = vmatpush1.msra.mxu0 0.0
        %356 = vmatprep.subr.mxu0 0.0
        %357 = vmatpush1.msra.mxu0 0.0
        %358 = vmatprep.subr.mxu0 0.0
        %359 = vmatpush1.msra.mxu0 0.0
        %360 = vmatprep.subr.mxu0 0.0
        %361 = vmatpush1.msra.mxu0 0.0
        %362 = vmatprep.subr.mxu0 0.0
        %363 = vmatpush1.msra.mxu0 0.0
        %364 = vmatprep.subr.mxu0 0.0
        %365 = vmatpush1.msra.mxu0 0.0
        %366 = vmatprep.subr.mxu0 0.0
        %367 = vmatpush1.msra.mxu0 0.0
        %368 = vmatprep.subr.mxu0 0.0
        %369 = vmatpush1.msra.mxu0 0.0
        %370 = vmatprep.subr.mxu0 0.0
        %371 = vmatpush1.msra.mxu0 0.0
        %372 = vmatprep.subr.mxu0 0.0
        %373 = vmatpush1.msra.mxu0 0.0
        %374 = vmatprep.subr.mxu0 0.0
        %375 = vmatpush1.msra.mxu0 0.0
        %376 = vmatprep.subr.mxu0 0.0
        %377 = vmatpush1.msra.mxu0 0.0
        %378 = vmatprep.subr.mxu0 0.0
        %379 = vmatpush1.msra.mxu0 0.0
        %380 = vmatprep.subr.mxu0 0.0
        %381 = vmatpush1.msra.mxu0 0.0
        %382 = vmatprep.mubr.f32.mxu0 0.0
        %383 = vmatmul.mubr.f32.gmra.mrb[0].mxu0 %v316
        %v384 = vpop.f32.mrb[0].mxu0
        %v385 = vadd.f32 0.0, %v384
        %v386 = vpop.f32.mrb[0].mxu0
        %v387 = vadd.f32 0.0, %v386
        %388 = vdwg.mxu0
        %v389 = vmax.f32 %v385, 0.0
        %v390 = vmax.f32 %v387, 0.0
        %v391 = vld [vmem:[#allocation8] sm:$0xff]
        %v393 = vsel %vm314, %v391, 0
        %395 = vmatprep.subr.mxu0 %v312
        %396 = vmatpush1.msra.mxu0 %v311
        %397 = vmatprep.subr.mxu0 0.0
        %398 = vmatpush1.msra.mxu0 0.0
        %399 = vmatprep.subr.mxu0 0.0
        %400 = vmatpush1.msra.mxu0 0.0
        %401 = vmatprep.subr.mxu0 0.0
        %402 = vmatpush1.msra.mxu0 0.0
        %403 = vmatprep.subr.mxu0 0.0
        %404 = vmatpush1.msra.mxu0 0.0
        %405 = vmatprep.subr.mxu0 0.0
        %406 = vmatpush1.msra.mxu0 0.0
        %407 = vmatprep.subr.mxu0 0.0
        %408 = vmatpush1.msra.mxu0 0.0
        %409 = vmatprep.subr.mxu0 0.0
        %410 = vmatpush1.msra.mxu0 0.0
        %411 = vmatprep.subr.mxu0 0.0
        %412 = vmatpush1.msra.mxu0 0.0
        %413 = vmatprep.subr.mxu0 0.0
        %414 = vmatpush1.msra.mxu0 0.0
        %415 = vmatprep.subr.mxu0 0.0
        %416 = vmatpush1.msra.mxu0 0.0
        %417 = vmatprep.subr.mxu0 0.0
        %418 = vmatpush1.msra.mxu0 0.0
        %419 = vmatprep.subr.mxu0 0.0
        %420 = vmatpush1.msra.mxu0 0.0
        %421 = vmatprep.subr.mxu0 0.0
        %422 = vmatpush1.msra.mxu0 0.0
        %423 = vmatprep.subr.mxu0 0.0
        %424 = vmatpush1.msra.mxu0 0.0
        %425 = vmatprep.subr.mxu0 0.0
        %426 = vmatpush1.msra.mxu0 0.0
        %427 = vmatprep.subr.mxu0 0.0
        %428 = vmatpush1.msra.mxu0 0.0
        %429 = vmatprep.subr.mxu0 0.0
        %430 = vmatpush1.msra.mxu0 0.0
        %431 = vmatprep.subr.mxu0 0.0
        %432 = vmatpush1.msra.mxu0 0.0
        %433 = vmatprep.subr.mxu0 0.0
        %434 = vmatpush1.msra.mxu0 0.0
        %435 = vmatprep.subr.mxu0 0.0
        %436 = vmatpush1.msra.mxu0 0.0
        %437 = vmatprep.subr.mxu0 0.0
        %438 = vmatpush1.msra.mxu0 0.0
        %439 = vmatprep.subr.mxu0 0.0
        %440 = vmatpush1.msra.mxu0 0.0
        %441 = vmatprep.subr.mxu0 0.0
        %442 = vmatpush1.msra.mxu0 0.0
        %443 = vmatprep.subr.mxu0 0.0
        %444 = vmatpush1.msra.mxu0 0.0
        %445 = vmatprep.subr.mxu0 0.0
        %446 = vmatpush1.msra.mxu0 0.0
        %447 = vmatprep.subr.mxu0 0.0
        %448 = vmatpush1.msra.mxu0 0.0
        %449 = vmatprep.subr.mxu0 0.0
        %450 = vmatpush1.msra.mxu0 0.0
        %451 = vmatprep.subr.mxu0 0.0
        %452 = vmatpush1.msra.mxu0 0.0
        %453 = vmatprep.subr.mxu0 0.0
        %454 = vmatpush1.msra.mxu0 0.0
        %455 = vmatprep.subr.mxu0 0.0
        %456 = vmatpush1.msra.mxu0 0.0
        %457 = vmatprep.subr.mxu0 0.0
        %458 = vmatpush1.msra.mxu0 0.0
        %459 = vmatprep.mubr.f32.mxu0 0.0
        %460 = vmatmul.mubr.f32.gmra.mrb[0].mxu0 %v393
        %v461 = vpop.f32.mrb[0].mxu0
        %v462 = vadd.f32 0.0, %v461
        %v463 = vpop.f32.mrb[0].mxu0
        %v464 = vadd.f32 0.0, %v463
        %465 = vdwg.mxu0
        %v466 = vmax.f32 %v462, 0.0
        %v467 = vmax.f32 %v464, 0.0
        %468 = vxpose.xlu0.b32.start [1/16] %v466, 128
        %469 = vxpose.xlu0.b32.cont [2/16] 0.0, 128
        %470 = vxpose.xlu0.b32.cont [3/16] 0.0, 128
        %471 = vxpose.xlu0.b32.cont [4/16] 0.0, 128
        %472 = vxpose.xlu0.b32.cont [5/16] 0.0, 128
        %473 = vxpose.xlu0.b32.cont [6/16] 0.0, 128
        %474 = vxpose.xlu0.b32.cont [7/16] 0.0, 128
        %475 = vxpose.xlu0.b32.cont [8/16] 0.0, 128
        %476 = vxpose.xlu0.b32.cont [9/16] 0.0, 128
        %477 = vxpose.xlu0.b32.cont [10/16] 0.0, 128
        %478 = vxpose.xlu0.b32.cont [11/16] 0.0, 128
        %479 = vxpose.xlu0.b32.cont [12/16] 0.0, 128
        %480 = vxpose.xlu0.b32.cont [13/16] 0.0, 128
        %481 = vxpose.xlu0.b32.cont [14/16] 0.0, 128
        %482 = vxpose.xlu0.b32.cont [15/16] 0.0, 128
        %483 = vxpose.xlu0.b32.end [16/16] 0.0, 128
        %v484 = vpop.trf.xlu0
        %v485 = vpop.trf.xlu0
        %v486 = vpop.trf.xlu0
        %v487 = vpop.trf.xlu0
        %v488 = vpop.trf.xlu0
        %v489 = vpop.trf.xlu0
        %v490 = vpop.trf.xlu0
        %v491 = vpop.trf.xlu0
        %v492 = vpop.trf.xlu0
        %v493 = vpop.trf.xlu0
        %v494 = vpop.trf.xlu0
        %v495 = vpop.trf.xlu0
        %v496 = vpop.trf.xlu0
        %v497 = vpop.trf.xlu0
        %v498 = vpop.trf.xlu0
        %v499 = vpop.trf.xlu0
        %v501 = vsel %vm314, %v484, 0
        %v504 = vsel %vm314, %v485, 0
        %v507 = vsel %vm314, %v486, 0
        %v510 = vsel %vm314, %v487, 0
        %v513 = vsel %vm314, %v488, 0
        %v516 = vsel %vm314, %v489, 0
        %v519 = vsel %vm314, %v490, 0
        %v522 = vsel %vm314, %v491, 0
        %v525 = vsel %vm314, %v492, 0
        %v528 = vsel %vm314, %v493, 0
        %v531 = vsel %vm314, %v494, 0
        %v534 = vsel %vm314, %v495, 0
        %v537 = vsel %vm314, %v496, 0
        %v540 = vsel %vm314, %v497, 0
        %v543 = vsel %vm314, %v498, 0
        %v546 = vsel %vm314, %v499, 0
        %548 = vmatprep.subr.mxu0 %v390
        %549 = vmatpush1.msra.mxu0 %v389
        %550 = vmatprep.subr.mxu0 0.0
        %551 = vmatpush1.msra.mxu0 0.0
        %552 = vmatprep.subr.mxu0 0.0
        %553 = vmatpush1.msra.mxu0 0.0
        %554 = vmatprep.subr.mxu0 0.0
        %555 = vmatpush1.msra.mxu0 0.0
        %556 = vmatprep.subr.mxu0 0.0
        %557 = vmatpush1.msra.mxu0 0.0
        %558 = vmatprep.subr.mxu0 0.0
        %559 = vmatpush1.msra.mxu0 0.0
        %560 = vmatprep.subr.mxu0 0.0
        %561 = vmatpush1.msra.mxu0 0.0
        %562 = vmatprep.subr.mxu0 0.0
        %563 = vmatpush1.msra.mxu0 0.0
        %564 = vmatprep.subr.mxu0 0.0
        %565 = vmatpush1.msra.mxu0 0.0
        %566 = vmatprep.subr.mxu0 0.0
        %567 = vmatpush1.msra.mxu0 0.0
        %568 = vmatprep.subr.mxu0 0.0
        %569 = vmatpush1.msra.mxu0 0.0
        %570 = vmatprep.subr.mxu0 0.0
        %571 = vmatpush1.msra.mxu0 0.0
        %572 = vmatprep.subr.mxu0 0.0
        %573 = vmatpush1.msra.mxu0 0.0
        %574 = vmatprep.subr.mxu0 0.0
        %575 = vmatpush1.msra.mxu0 0.0
        %576 = vmatprep.subr.mxu0 0.0
        %577 = vmatpush1.msra.mxu0 0.0
        %578 = vmatprep.subr.mxu0 0.0
        %579 = vmatpush1.msra.mxu0 0.0
        %580 = vmatprep.subr.mxu0 0.0
        %581 = vmatpush1.msra.mxu0 0.0
        %582 = vmatprep.subr.mxu0 0.0
        %583 = vmatpush1.msra.mxu0 0.0
        %584 = vmatprep.subr.mxu0 0.0
        %585 = vmatpush1.msra.mxu0 0.0
        %586 = vmatprep.subr.mxu0 0.0
        %587 = vmatpush1.msra.mxu0 0.0
        %588 = vmatprep.subr.mxu0 0.0
        %589 = vmatpush1.msra.mxu0 0.0
        %590 = vmatprep.subr.mxu0 0.0
        %591 = vmatpush1.msra.mxu0 0.0
        %592 = vmatprep.subr.mxu0 0.0
        %593 = vmatpush1.msra.mxu0 0.0
        %594 = vmatprep.subr.mxu0 0.0
        %595 = vmatpush1.msra.mxu0 0.0
        %596 = vmatprep.subr.mxu0 0.0
        %597 = vmatpush1.msra.mxu0 0.0
        %598 = vmatprep.subr.mxu0 0.0
        %599 = vmatpush1.msra.mxu0 0.0
        %600 = vmatprep.subr.mxu0 0.0
        %601 = vmatpush1.msra.mxu0 0.0
        %602 = vmatprep.subr.mxu0 0.0
        %603 = vmatpush1.msra.mxu0 0.0
        %604 = vmatprep.subr.mxu0 0.0
        %605 = vmatpush1.msra.mxu0 0.0
        %606 = vmatprep.subr.mxu0 0.0
        %607 = vmatpush1.msra.mxu0 0.0
        %608 = vmatprep.subr.mxu0 0.0
        %609 = vmatpush1.msra.mxu0 0.0
        %610 = vmatprep.subr.mxu0 0.0
        %611 = vmatpush1.msra.mxu0 0.0
        %612 = vmatprep.mubr.f32.mxu0 0.0
        %613 = vmatmul.mubr.f32.gmra.mrb[0].mxu0 %v501
        %v614 = vpop.f32.mrb[0].mxu0
        %v615 = vadd.f32 0.0, %v614
        %v616 = vpop.f32.mrb[0].mxu0
        %v617 = vadd.f32 0.0, %v616
        %618 = vmatprep.mubr.f32.mxu0 0.0
        %619 = vmatmul.mubr.f32.gmra.mrb[0].mxu0 %v504
        %v620 = vpop.f32.mrb[0].mxu0
        %v621 = vadd.f32 0.0, %v620
        %v622 = vpop.f32.mrb[0].mxu0
        %v623 = vadd.f32 0.0, %v622
        %624 = vmatprep.mubr.f32.mxu0 0.0
        %625 = vmatmul.mubr.f32.gmra.mrb[0].mxu0 %v507
        %v626 = vpop.f32.mrb[0].mxu0
        %v627 = vadd.f32 0.0, %v626
        %v628 = vpop.f32.mrb[0].mxu0
        %v629 = vadd.f32 0.0, %v628
        %630 = vmatprep.mubr.f32.mxu0 0.0
        %631 = vmatmul.mubr.f32.gmra.mrb[0].mxu0 %v510
        %v632 = vpop.f32.mrb[0].mxu0
        %v633 = vadd.f32 0.0, %v632
        %v634 = vpop.f32.mrb[0].mxu0
        %v635 = vadd.f32 0.0, %v634
        %636 = vmatprep.mubr.f32.mxu0 0.0
        %637 = vmatmul.mubr.f32.gmra.mrb[0].mxu0 %v513
        %v638 = vpop.f32.mrb[0].mxu0
        %v639 = vadd.f32 0.0, %v638
        %v640 = vpop.f32.mrb[0].mxu0
        %v641 = vadd.f32 0.0, %v640
        %642 = vmatprep.mubr.f32.mxu0 0.0
        %643 = vmatmul.mubr.f32.gmra.mrb[0].mxu0 %v516
        %v644 = vpop.f32.mrb[0].mxu0
        %v645 = vadd.f32 0.0, %v644
        %v646 = vpop.f32.mrb[0].mxu0
        %v647 = vadd.f32 0.0, %v646
        %648 = vmatprep.mubr.f32.mxu0 0.0
        %649 = vmatmul.mubr.f32.gmra.mrb[0].mxu0 %v519
        %v650 = vpop.f32.mrb[0].mxu0
        %v651 = vadd.f32 0.0, %v650
        %v652 = vpop.f32.mrb[0].mxu0
        %v653 = vadd.f32 0.0, %v652
        %654 = vmatprep.mubr.f32.mxu0 0.0
        %655 = vmatmul.mubr.f32.gmra.mrb[0].mxu0 %v522
        %v656 = vpop.f32.mrb[0].mxu0
        %v657 = vadd.f32 0.0, %v656
        %v658 = vpop.f32.mrb[0].mxu0
        %v659 = vadd.f32 0.0, %v658
        %660 = vmatprep.mubr.f32.mxu0 0.0
        %661 = vmatmul.mubr.f32.gmra.mrb[0].mxu0 %v525
        %v662 = vpop.f32.mrb[0].mxu0
        %v663 = vadd.f32 0.0, %v662
        %v664 = vpop.f32.mrb[0].mxu0
        %v665 = vadd.f32 0.0, %v664
        %666 = vmatprep.mubr.f32.mxu0 0.0
        %667 = vmatmul.mubr.f32.gmra.mrb[0].mxu0 %v528
        %v668 = vpop.f32.mrb[0].mxu0
        %v669 = vadd.f32 0.0, %v668
        %v670 = vpop.f32.mrb[0].mxu0
        %v671 = vadd.f32 0.0, %v670
        %672 = vmatprep.mubr.f32.mxu0 0.0
        %673 = vmatmul.mubr.f32.gmra.mrb[0].mxu0 %v531
        %v674 = vpop.f32.mrb[0].mxu0
        %v675 = vadd.f32 0.0, %v674
        %v676 = vpop.f32.mrb[0].mxu0
        %v677 = vadd.f32 0.0, %v676
        %678 = vmatprep.mubr.f32.mxu0 0.0
        %679 = vmatmul.mubr.f32.gmra.mrb[0].mxu0 %v534
        %v680 = vpop.f32.mrb[0].mxu0
        %v681 = vadd.f32 0.0, %v680
        %v682 = vpop.f32.mrb[0].mxu0
        %v683 = vadd.f32 0.0, %v682
        %684 = vmatprep.mubr.f32.mxu0 0.0
        %685 = vmatmul.mubr.f32.gmra.mrb[0].mxu0 %v537
        %v686 = vpop.f32.mrb[0].mxu0
        %v687 = vadd.f32 0.0, %v686
        %v688 = vpop.f32.mrb[0].mxu0
        %v689 = vadd.f32 0.0, %v688
        %690 = vmatprep.mubr.f32.mxu0 0.0
        %691 = vmatmul.mubr.f32.gmra.mrb[0].mxu0 %v540
        %v692 = vpop.f32.mrb[0].mxu0
        %v693 = vadd.f32 0.0, %v692
        %v694 = vpop.f32.mrb[0].mxu0
        %v695 = vadd.f32 0.0, %v694
        %696 = vmatprep.mubr.f32.mxu0 0.0
        %697 = vmatmul.mubr.f32.gmra.mrb[0].mxu0 %v543
        %v698 = vpop.f32.mrb[0].mxu0
        %v699 = vadd.f32 0.0, %v698
        %v700 = vpop.f32.mrb[0].mxu0
        %v701 = vadd.f32 0.0, %v700
        %702 = vmatprep.mubr.f32.mxu0 0.0
        %703 = vmatmul.mubr.f32.gmra.mrb[0].mxu0 %v546
        %v704 = vpop.f32.mrb[0].mxu0
        %v705 = vadd.f32 0.0, %v704
        %v706 = vpop.f32.mrb[0].mxu0
        %v707 = vadd.f32 0.0, %v706
        %708 = vdwg.mxu0
        %709 = vxpose.xlu0.b32.start [1/16] %v389, 128
        %710 = vxpose.xlu0.b32.cont [2/16] 0.0, 128
        %711 = vxpose.xlu0.b32.cont [3/16] 0.0, 128
        %712 = vxpose.xlu0.b32.cont [4/16] 0.0, 128
        %713 = vxpose.xlu0.b32.cont [5/16] 0.0, 128
        %714 = vxpose.xlu0.b32.cont [6/16] 0.0, 128
        %715 = vxpose.xlu0.b32.cont [7/16] 0.0, 128
        %716 = vxpose.xlu0.b32.cont [8/16] 0.0, 128
        %717 = vxpose.xlu0.b32.cont [9/16] 0.0, 128
        %718 = vxpose.xlu0.b32.cont [10/16] 0.0, 128
        %719 = vxpose.xlu0.b32.cont [11/16] 0.0, 128
        %720 = vxpose.xlu0.b32.cont [12/16] 0.0, 128
        %721 = vxpose.xlu0.b32.cont [13/16] 0.0, 128
        %722 = vxpose.xlu0.b32.cont [14/16] 0.0, 128
        %723 = vxpose.xlu0.b32.cont [15/16] 0.0, 128
        %724 = vxpose.xlu0.b32.end [16/16] 0.0, 128
        %v725 = vpop.trf.xlu0
        %v726 = vpop.trf.xlu0
        %v727 = vpop.trf.xlu0
        %v728 = vpop.trf.xlu0
        %v729 = vpop.trf.xlu0
        %v730 = vpop.trf.xlu0
        %v731 = vpop.trf.xlu0
        %v732 = vpop.trf.xlu0
        %v733 = vpop.trf.xlu0
        %v734 = vpop.trf.xlu0
        %v735 = vpop.trf.xlu0
        %v736 = vpop.trf.xlu0
        %v737 = vpop.trf.xlu0
        %v738 = vpop.trf.xlu0
        %v739 = vpop.trf.xlu0
        %v740 = vpop.trf.xlu0
        %v742 = vsel %vm314, %v725, 0
        %v745 = vsel %vm314, %v726, 0
        %v748 = vsel %vm314, %v727, 0
        %v751 = vsel %vm314, %v728, 0
        %v754 = vsel %vm314, %v729, 0
        %v757 = vsel %vm314, %v730, 0
        %v760 = vsel %vm314, %v731, 0
        %v763 = vsel %vm314, %v732, 0
        %v766 = vsel %vm314, %v733, 0
        %v769 = vsel %vm314, %v734, 0
        %v772 = vsel %vm314, %v735, 0
        %v775 = vsel %vm314, %v736, 0
        %v778 = vsel %vm314, %v737, 0
        %v781 = vsel %vm314, %v738, 0
        %v784 = vsel %vm314, %v739, 0
        %v787 = vsel %vm314, %v740, 0
        %789 = vmatprep.subr.mxu0 %v467
        %790 = vmatpush1.msra.mxu0 %v466
        %791 = vmatprep.subr.mxu0 0.0
        %792 = vmatpush1.msra.mxu0 0.0
        %793 = vmatprep.subr.mxu0 0.0
        %794 = vmatpush1.msra.mxu0 0.0
        %795 = vmatprep.subr.mxu0 0.0
        %796 = vmatpush1.msra.mxu0 0.0
        %797 = vmatprep.subr.mxu0 0.0
        %798 = vmatpush1.msra.mxu0 0.0
        %799 = vmatprep.subr.mxu0 0.0
        %800 = vmatpush1.msra.mxu0 0.0
        %801 = vmatprep.subr.mxu0 0.0
        %802 = vmatpush1.msra.mxu0 0.0
        %803 = vmatprep.subr.mxu0 0.0
        %804 = vmatpush1.msra.mxu0 0.0
        %805 = vmatprep.subr.mxu0 0.0
        %806 = vmatpush1.msra.mxu0 0.0
        %807 = vmatprep.subr.mxu0 0.0
        %808 = vmatpush1.msra.mxu0 0.0
        %809 = vmatprep.subr.mxu0 0.0
        %810 = vmatpush1.msra.mxu0 0.0
        %811 = vmatprep.subr.mxu0 0.0
        %812 = vmatpush1.msra.mxu0 0.0
        %813 = vmatprep.subr.mxu0 0.0
        %814 = vmatpush1.msra.mxu0 0.0
        %815 = vmatprep.subr.mxu0 0.0
        %816 = vmatpush1.msra.mxu0 0.0
        %817 = vmatprep.subr.mxu0 0.0
        %818 = vmatpush1.msra.mxu0 0.0
        %819 = vmatprep.subr.mxu0 0.0
        %820 = vmatpush1.msra.mxu0 0.0
        %821 = vmatprep.subr.mxu0 0.0
        %822 = vmatpush1.msra.mxu0 0.0
        %823 = vmatprep.subr.mxu0 0.0
        %824 = vmatpush1.msra.mxu0 0.0
        %825 = vmatprep.subr.mxu0 0.0
        %826 = vmatpush1.msra.mxu0 0.0
        %827 = vmatprep.subr.mxu0 0.0
        %828 = vmatpush1.msra.mxu0 0.0
        %829 = vmatprep.subr.mxu0 0.0
        %830 = vmatpush1.msra.mxu0 0.0
        %831 = vmatprep.subr.mxu0 0.0
        %832 = vmatpush1.msra.mxu0 0.0
        %833 = vmatprep.subr.mxu0 0.0
        %834 = vmatpush1.msra.mxu0 0.0
        %835 = vmatprep.subr.mxu0 0.0
        %836 = vmatpush1.msra.mxu0 0.0
        %837 = vmatprep.subr.mxu0 0.0
        %838 = vmatpush1.msra.mxu0 0.0
        %839 = vmatprep.subr.mxu0 0.0
        %840 = vmatpush1.msra.mxu0 0.0
        %841 = vmatprep.subr.mxu0 0.0
        %842 = vmatpush1.msra.mxu0 0.0
        %843 = vmatprep.subr.mxu0 0.0
        %844 = vmatpush1.msra.mxu0 0.0
        %845 = vmatprep.subr.mxu0 0.0
        %846 = vmatpush1.msra.mxu0 0.0
        %847 = vmatprep.subr.mxu0 0.0
        %848 = vmatpush1.msra.mxu0 0.0
        %849 = vmatprep.subr.mxu0 0.0
        %850 = vmatpush1.msra.mxu0 0.0
        %851 = vmatprep.subr.mxu0 0.0
        %852 = vmatpush1.msra.mxu0 0.0
        %853 = vmatprep.mubr.f32.mxu0 0.0
        %854 = vmatmul.mubr.f32.gmra.mrb[0].mxu0 %v742
        %v855 = vpop.f32.mrb[0].mxu0
        %v856 = vadd.f32 %v615, %v855
        %v857 = vpop.f32.mrb[0].mxu0
        %v858 = vadd.f32 %v617, %v857
        %859 = vmatprep.mubr.f32.mxu0 0.0
        %860 = vmatmul.mubr.f32.gmra.mrb[0].mxu0 %v745
        %v861 = vpop.f32.mrb[0].mxu0
        %v862 = vadd.f32 %v621, %v861
        %v863 = vpop.f32.mrb[0].mxu0
        %v864 = vadd.f32 %v623, %v863
        %865 = vmatprep.mubr.f32.mxu0 0.0
        %866 = vmatmul.mubr.f32.gmra.mrb[0].mxu0 %v748
        %v867 = vpop.f32.mrb[0].mxu0
        %v868 = vadd.f32 %v627, %v867
        %v869 = vpop.f32.mrb[0].mxu0
        %v870 = vadd.f32 %v629, %v869
        %871 = vmatprep.mubr.f32.mxu0 0.0
        %872 = vmatmul.mubr.f32.gmra.mrb[0].mxu0 %v751
        %v873 = vpop.f32.mrb[0].mxu0
        %v874 = vadd.f32 %v633, %v873
        %v875 = vpop.f32.mrb[0].mxu0
        %v876 = vadd.f32 %v635, %v875
        %877 = vmatprep.mubr.f32.mxu0 0.0
        %878 = vmatmul.mubr.f32.gmra.mrb[0].mxu0 %v754
        %v879 = vpop.f32.mrb[0].mxu0
        %v880 = vadd.f32 %v639, %v879
        %v881 = vpop.f32.mrb[0].mxu0
        %v882 = vadd.f32 %v641, %v881
        %883 = vmatprep.mubr.f32.mxu0 0.0
        %884 = vmatmul.mubr.f32.gmra.mrb[0].mxu0 %v757
        %v885 = vpop.f32.mrb[0].mxu0
        %v886 = vadd.f32 %v645, %v885
        %v887 = vpop.f32.mrb[0].mxu0
        %v888 = vadd.f32 %v647, %v887
        %889 = vmatprep.mubr.f32.mxu0 0.0
        %890 = vmatmul.mubr.f32.gmra.mrb[0].mxu0 %v760
        %v891 = vpop.f32.mrb[0].mxu0
        %v892 = vadd.f32 %v651, %v891
        %v893 = vpop.f32.mrb[0].mxu0
        %v894 = vadd.f32 %v653, %v893
        %895 = vmatprep.mubr.f32.mxu0 0.0
        %896 = vmatmul.mubr.f32.gmra.mrb[0].mxu0 %v763
        %v897 = vpop.f32.mrb[0].mxu0
        %v898 = vadd.f32 %v657, %v897
        %v899 = vpop.f32.mrb[0].mxu0
        %v900 = vadd.f32 %v659, %v899
        %901 = vmatprep.mubr.f32.mxu0 0.0
        %902 = vmatmul.mubr.f32.gmra.mrb[0].mxu0 %v766
        %v903 = vpop.f32.mrb[0].mxu0
        %v904 = vadd.f32 %v663, %v903
        %v905 = vpop.f32.mrb[0].mxu0
        %v906 = vadd.f32 %v665, %v905
        %907 = vmatprep.mubr.f32.mxu0 0.0
        %908 = vmatmul.mubr.f32.gmra.mrb[0].mxu0 %v769
        %v909 = vpop.f32.mrb[0].mxu0
        %v910 = vadd.f32 %v669, %v909
        %v911 = vpop.f32.mrb[0].mxu0
        %v912 = vadd.f32 %v671, %v911
        %913 = vmatprep.mubr.f32.mxu0 0.0
        %914 = vmatmul.mubr.f32.gmra.mrb[0].mxu0 %v772
        %v915 = vpop.f32.mrb[0].mxu0
        %v916 = vadd.f32 %v675, %v915
        %v917 = vpop.f32.mrb[0].mxu0
        %v918 = vadd.f32 %v677, %v917
        %919 = vmatprep.mubr.f32.mxu0 0.0
        %920 = vmatmul.mubr.f32.gmra.mrb[0].mxu0 %v775
        %v921 = vpop.f32.mrb[0].mxu0
        %v922 = vadd.f32 %v681, %v921
        %v923 = vpop.f32.mrb[0].mxu0
        %v924 = vadd.f32 %v683, %v923
        %925 = vmatprep.mubr.f32.mxu0 0.0
        %926 = vmatmul.mubr.f32.gmra.mrb[0].mxu0 %v778
        %v927 = vpop.f32.mrb[0].mxu0
        %v928 = vadd.f32 %v687, %v927
        %v929 = vpop.f32.mrb[0].mxu0
        %v930 = vadd.f32 %v689, %v929
        %931 = vmatprep.mubr.f32.mxu0 0.0
        %932 = vmatmul.mubr.f32.gmra.mrb[0].mxu0 %v781
        %v933 = vpop.f32.mrb[0].mxu0
        %v934 = vadd.f32 %v693, %v933
        %v935 = vpop.f32.mrb[0].mxu0
        %v936 = vadd.f32 %v695, %v935
        %937 = vmatprep.mubr.f32.mxu0 0.0
        %938 = vmatmul.mubr.f32.gmra.mrb[0].mxu0 %v784
        %v939 = vpop.f32.mrb[0].mxu0
        %v940 = vadd.f32 %v699, %v939
        %v941 = vpop.f32.mrb[0].mxu0
        %v942 = vadd.f32 %v701, %v941
        %943 = vmatprep.mubr.f32.mxu0 0.0
        %944 = vmatmul.mubr.f32.gmra.mrb[0].mxu0 %v787
        %v945 = vpop.f32.mrb[0].mxu0
        %v946 = vadd.f32 %v705, %v945
        %v947 = vpop.f32.mrb[0].mxu0
        %v948 = vadd.f32 %v707, %v947
        %949 = vdwg.mxu0
        %v950 = vmul.f32 %v856, 0.5
        %v951 = vmul.f32 %v858, 0.5
        %v952 = vmul.f32 %v862, 0.5
        %v953 = vmul.f32 %v864, 0.5
        %v954 = vmul.f32 %v868, 0.5
        %v955 = vmul.f32 %v870, 0.5
        %v956 = vmul.f32 %v874, 0.5
        %v957 = vmul.f32 %v876, 0.5
        %v958 = vmul.f32 %v880, 0.5
        %v959 = vmul.f32 %v882, 0.5
        %v960 = vmul.f32 %v886, 0.5
        %v961 = vmul.f32 %v888, 0.5
        %v962 = vmul.f32 %v892, 0.5
        %v963 = vmul.f32 %v894, 0.5
        %v964 = vmul.f32 %v898, 0.5
        %v965 = vmul.f32 %v900, 0.5
        %v966 = vmul.f32 %v904, 0.5
        %v967 = vmul.f32 %v906, 0.5
        %v968 = vmul.f32 %v910, 0.5
        %v969 = vmul.f32 %v912, 0.5
        %v970 = vmul.f32 %v916, 0.5
        %v971 = vmul.f32 %v918, 0.5
        %v972 = vmul.f32 %v922, 0.5
        %v973 = vmul.f32 %v924, 0.5
        %v974 = vmul.f32 %v928, 0.5
        %v975 = vmul.f32 %v930, 0.5
        %v976 = vmul.f32 %v934, 0.5
        %v977 = vmul.f32 %v936, 0.5
        %v978 = vmul.f32 %v940, 0.5
        %v979 = vmul.f32 %v942, 0.5
        %v980 = vmul.f32 %v946, 0.5
        %v981 = vmul.f32 %v948, 0.5
        %v982 = vadd.f32 %v950, %v952
        %v983 = vadd.f32 %v982, %v954
        %v984 = vadd.f32 %v983, %v956
        %v985 = vadd.f32 %v984, %v958
        %v986 = vadd.f32 %v985, %v960
        %v987 = vadd.f32 %v986, %v962
        %v988 = vadd.f32 %v987, %v964
        %v989 = vadd.f32 %v988, %v966
        %v990 = vadd.f32 %v989, %v968
        %v991 = vadd.f32 %v990, %v970
        %v992 = vadd.f32 %v991, %v972
        %v993 = vadd.f32 %v992, %v974
        %v994 = vadd.f32 %v993, %v976
        %v995 = vadd.f32 %v994, %v978
        %v996 = vadd.f32 %v995, %v980
        %v997 = vrot.slane %v996, 4
        %v998 = vadd.f32 %v996, %v997
        %v999 = vrot.slane %v998, 2
        %v1000 = vadd.f32 %v998, %v999
        %v1001 = vrot.slane %v1000, 1
        %v1002 = vadd.f32 %v1000, %v1001
        %v1003 = vadd.f32 %v951, %v953
        %v1004 = vadd.f32 %v1003, %v955
        %v1005 = vadd.f32 %v1004, %v957
        %v1006 = vadd.f32 %v1005, %v959
        %v1007 = vadd.f32 %v1006, %v961
        %v1008 = vadd.f32 %v1007, %v963
        %v1009 = vadd.f32 %v1008, %v965
        %v1010 = vadd.f32 %v1009, %v967
        %v1011 = vadd.f32 %v1010, %v969
        %v1012 = vadd.f32 %v1011, %v971
        %v1013 = vadd.f32 %v1012, %v973
        %v1014 = vadd.f32 %v1013, %v975
        %v1015 = vadd.f32 %v1014, %v977
        %v1016 = vadd.f32 %v1015, %v979
        %v1017 = vadd.f32 %v1016, %v981
        %v1018 = vrot.slane %v1017, 4
        %v1019 = vadd.f32 %v1017, %v1018
        %v1020 = vrot.slane %v1019, 2
        %v1021 = vadd.f32 %v1019, %v1020
        %v1022 = vrot.slane %v1021, 1
        %v1023 = vadd.f32 %v1021, %v1022
        %v1024 = vadd.f32 %v1002, 0.0
        %v1025 = vadd.f32 %v1023, 0.0
        %v1026 = vpack.c.bf16 %v952, %v950
        %v1027 = vpack.c.bf16 %v953, %v951
        %v1028 = vpack.c.bf16 %v956, %v954
        %v1029 = vpack.c.bf16 %v957, %v955
        %v1030 = vpack.c.bf16 %v960, %v958
        %v1031 = vpack.c.bf16 %v961, %v959
        %v1032 = vpack.c.bf16 %v964, %v962
        %v1033 = vpack.c.bf16 %v965, %v963
        %v1034 = vpack.c.bf16 %v968, %v966
        %v1035 = vpack.c.bf16 %v969, %v967
        %v1036 = vpack.c.bf16 %v972, %v970
        %v1037 = vpack.c.bf16 %v973, %v971
        %v1038 = vpack.c.bf16 %v976, %v974
        %v1039 = vpack.c.bf16 %v977, %v975
        %v1040 = vpack.c.bf16 %v980, %v978
        %v1041 = vpack.c.bf16 %v981, %v979
        %1042 = vst [vmem:[#allocation2] sm:$0xff] %v1026
        %1043 = vst [vmem:[#allocation2 + $0x8] sm:$0xff] %v1027
        %1044 = vst [vmem:[#allocation2 + $0x10] sm:$0xff] %v1028
        %1045 = vst [vmem:[#allocation2 + $0x18] sm:$0xff] %v1029
        %1046 = vst [vmem:[#allocation2 + $0x20] sm:$0xff] %v1030
        %1047 = vst [vmem:[#allocation2 + $0x28] sm:$0xff] %v1031
        %1048 = vst [vmem:[#allocation2 + $0x30] sm:$0xff] %v1032
        %1049 = vst [vmem:[#allocation2 + $0x38] sm:$0xff] %v1033
        %1050 = vst [vmem:[#allocation2 + $0x40] sm:$0xff] %v1034
        %1051 = vst [vmem:[#allocation2 + $0x48] sm:$0xff] %v1035
        %1052 = vst [vmem:[#allocation2 + $0x50] sm:$0xff] %v1036
        %1053 = vst [vmem:[#allocation2 + $0x58] sm:$0xff] %v1037
        %1054 = vst [vmem:[#allocation2 + $0x60] sm:$0xff] %v1038
        %1055 = vst [vmem:[#allocation2 + $0x68] sm:$0xff] %v1039
        %1056 = vst [vmem:[#allocation2 + $0x70] sm:$0xff] %v1040
        %1057 = vst [vmem:[#allocation2 + $0x78] sm:$0xff] %v1041
        %1058 = vxpose.xlu0.b32.start [1/16] %v467, 128
        %1059 = vxpose.xlu0.b32.cont [2/16] 0.0, 128
        %1060 = vxpose.xlu0.b32.cont [3/16] 0.0, 128
        %1061 = vxpose.xlu0.b32.cont [4/16] 0.0, 128
        %1062 = vxpose.xlu0.b32.cont [5/16] 0.0, 128
        %1063 = vxpose.xlu0.b32.cont [6/16] 0.0, 128
        %1064 = vxpose.xlu0.b32.cont [7/16] 0.0, 128
        %1065 = vxpose.xlu0.b32.cont [8/16] 0.0, 128
        %1066 = vxpose.xlu0.b32.cont [9/16] 0.0, 128
        %1067 = vxpose.xlu0.b32.cont [10/16] 0.0, 128
        %1068 = vxpose.xlu0.b32.cont [11/16] 0.0, 128
        %1069 = vxpose.xlu0.b32.cont [12/16] 0.0, 128
        %1070 = vxpose.xlu0.b32.cont [13/16] 0.0, 128
        %1071 = vxpose.xlu0.b32.cont [14/16] 0.0, 128
        %1072 = vxpose.xlu0.b32.cont [15/16] 0.0, 128
        %1073 = vxpose.xlu0.b32.end [16/16] 0.0, 128
        %v1074 = vpop.trf.xlu0
        %v1075 = vpop.trf.xlu0
        %v1076 = vpop.trf.xlu0
        %v1077 = vpop.trf.xlu0
        %v1078 = vpop.trf.xlu0
        %v1079 = vpop.trf.xlu0
        %v1080 = vpop.trf.xlu0
        %v1081 = vpop.trf.xlu0
        %v1082 = vpop.trf.xlu0
        %v1083 = vpop.trf.xlu0
        %v1084 = vpop.trf.xlu0
        %v1085 = vpop.trf.xlu0
        %v1086 = vpop.trf.xlu0
        %v1087 = vpop.trf.xlu0
        %v1088 = vpop.trf.xlu0
        %v1089 = vpop.trf.xlu0
        %v1091 = vsel %vm314, %v1074, 0
        %v1094 = vsel %vm314, %v1075, 0
        %v1097 = vsel %vm314, %v1076, 0
        %v1100 = vsel %vm314, %v1077, 0
        %v1103 = vsel %vm314, %v1078, 0
        %v1106 = vsel %vm314, %v1079, 0
        %v1109 = vsel %vm314, %v1080, 0
        %v1112 = vsel %vm314, %v1081, 0
        %v1115 = vsel %vm314, %v1082, 0
        %v1118 = vsel %vm314, %v1083, 0
        %v1121 = vsel %vm314, %v1084, 0
        %v1124 = vsel %vm314, %v1085, 0
        %v1127 = vsel %vm314, %v1086, 0
        %v1130 = vsel %vm314, %v1087, 0
        %v1133 = vsel %vm314, %v1088, 0
        %v1136 = vsel %vm314, %v1089, 0
        %1138 = vmatprep.subr.mxu0 %v390
        %1139 = vmatpush1.msra.mxu0 %v389
        %1140 = vmatprep.subr.mxu0 0.0
        %1141 = vmatpush1.msra.mxu0 0.0
        %1142 = vmatprep.subr.mxu0 0.0
        %1143 = vmatpush1.msra.mxu0 0.0
        %1144 = vmatprep.subr.mxu0 0.0
        %1145 = vmatpush1.msra.mxu0 0.0
        %1146 = vmatprep.subr.mxu0 0.0
        %1147 = vmatpush1.msra.mxu0 0.0
        %1148 = vmatprep.subr.mxu0 0.0
        %1149 = vmatpush1.msra.mxu0 0.0
        %1150 = vmatprep.subr.mxu0 0.0
        %1151 = vmatpush1.msra.mxu0 0.0
        %1152 = vmatprep.subr.mxu0 0.0
        %1153 = vmatpush1.msra.mxu0 0.0
        %1154 = vmatprep.subr.mxu0 0.0
        %1155 = vmatpush1.msra.mxu0 0.0
        %1156 = vmatprep.subr.mxu0 0.0
        %1157 = vmatpush1.msra.mxu0 0.0
        %1158 = vmatprep.subr.mxu0 0.0
        %1159 = vmatpush1.msra.mxu0 0.0
        %1160 = vmatprep.subr.mxu0 0.0
        %1161 = vmatpush1.msra.mxu0 0.0
        %1162 = vmatprep.subr.mxu0 0.0
        %1163 = vmatpush1.msra.mxu0 0.0
        %1164 = vmatprep.subr.mxu0 0.0
        %1165 = vmatpush1.msra.mxu0 0.0
        %1166 = vmatprep.subr.mxu0 0.0
        %1167 = vmatpush1.msra.mxu0 0.0
        %1168 = vmatprep.subr.mxu0 0.0
        %1169 = vmatpush1.msra.mxu0 0.0
        %1170 = vmatprep.subr.mxu0 0.0
        %1171 = vmatpush1.msra.mxu0 0.0
        %1172 = vmatprep.subr.mxu0 0.0
        %1173 = vmatpush1.msra.mxu0 0.0
        %1174 = vmatprep.subr.mxu0 0.0
        %1175 = vmatpush1.msra.mxu0 0.0
        %1176 = vmatprep.subr.mxu0 0.0
        %1177 = vmatpush1.msra.mxu0 0.0
        %1178 = vmatprep.subr.mxu0 0.0
        %1179 = vmatpush1.msra.mxu0 0.0
        %1180 = vmatprep.subr.mxu0 0.0
        %1181 = vmatpush1.msra.mxu0 0.0
        %1182 = vmatprep.subr.mxu0 0.0
        %1183 = vmatpush1.msra.mxu0 0.0
        %1184 = vmatprep.subr.mxu0 0.0
        %1185 = vmatpush1.msra.mxu0 0.0
        %1186 = vmatprep.subr.mxu0 0.0
        %1187 = vmatpush1.msra.mxu0 0.0
        %1188 = vmatprep.subr.mxu0 0.0
        %1189 = vmatpush1.msra.mxu0 0.0
        %1190 = vmatprep.subr.mxu0 0.0
        %1191 = vmatpush1.msra.mxu0 0.0
        %1192 = vmatprep.subr.mxu0 0.0
        %1193 = vmatpush1.msra.mxu0 0.0
        %1194 = vmatprep.subr.mxu0 0.0
        %1195 = vmatpush1.msra.mxu0 0.0
        %1196 = vmatprep.subr.mxu0 0.0
        %1197 = vmatpush1.msra.mxu0 0.0
        %1198 = vmatprep.subr.mxu0 0.0
        %1199 = vmatpush1.msra.mxu0 0.0
        %1200 = vmatprep.subr.mxu0 0.0
        %1201 = vmatpush1.msra.mxu0 0.0
        %1202 = vmatprep.mubr.f32.mxu0 0.0
        %1203 = vmatmul.mubr.f32.gmra.mrb[0].mxu0 %v1091
        %v1204 = vpop.f32.mrb[0].mxu0
        %v1205 = vadd.f32 0.0, %v1204
        %v1206 = vpop.f32.mrb[0].mxu0
        %v1207 = vadd.f32 0.0, %v1206
        %1208 = vmatprep.mubr.f32.mxu0 0.0
        %1209 = vmatmul.mubr.f32.gmra.mrb[0].mxu0 %v1094
        %v1210 = vpop.f32.mrb[0].mxu0
        %v1211 = vadd.f32 0.0, %v1210
        %v1212 = vpop.f32.mrb[0].mxu0
        %v1213 = vadd.f32 0.0, %v1212
        %1214 = vmatprep.mubr.f32.mxu0 0.0
        %1215 = vmatmul.mubr.f32.gmra.mrb[0].mxu0 %v1097
        %v1216 = vpop.f32.mrb[0].mxu0
        %v1217 = vadd.f32 0.0, %v1216
        %v1218 = vpop.f32.mrb[0].mxu0
        %v1219 = vadd.f32 0.0, %v1218
        %1220 = vmatprep.mubr.f32.mxu0 0.0
        %1221 = vmatmul.mubr.f32.gmra.mrb[0].mxu0 %v1100
        %v1222 = vpop.f32.mrb[0].mxu0
        %v1223 = vadd.f32 0.0, %v1222
        %v1224 = vpop.f32.mrb[0].mxu0
        %v1225 = vadd.f32 0.0, %v1224
        %1226 = vmatprep.mubr.f32.mxu0 0.0
        %1227 = vmatmul.mubr.f32.gmra.mrb[0].mxu0 %v1103
        %v1228 = vpop.f32.mrb[0].mxu0
        %v1229 = vadd.f32 0.0, %v1228
        %v1230 = vpop.f32.mrb[0].mxu0
        %v1231 = vadd.f32 0.0, %v1230
        %1232 = vmatprep.mubr.f32.mxu0 0.0
        %1233 = vmatmul.mubr.f32.gmra.mrb[0].mxu0 %v1106
        %v1234 = vpop.f32.mrb[0].mxu0
        %v1235 = vadd.f32 0.0, %v1234
        %v1236 = vpop.f32.mrb[0].mxu0
        %v1237 = vadd.f32 0.0, %v1236
        %1238 = vmatprep.mubr.f32.mxu0 0.0
        %1239 = vmatmul.mubr.f32.gmra.mrb[0].mxu0 %v1109
        %v1240 = vpop.f32.mrb[0].mxu0
        %v1241 = vadd.f32 0.0, %v1240
        %v1242 = vpop.f32.mrb[0].mxu0
        %v1243 = vadd.f32 0.0, %v1242
        %1244 = vmatprep.mubr.f32.mxu0 0.0
        %1245 = vmatmul.mubr.f32.gmra.mrb[0].mxu0 %v1112
        %v1246 = vpop.f32.mrb[0].mxu0
        %v1247 = vadd.f32 0.0, %v1246
        %v1248 = vpop.f32.mrb[0].mxu0
        %v1249 = vadd.f32 0.0, %v1248
        %1250 = vmatprep.mubr.f32.mxu0 0.0
        %1251 = vmatmul.mubr.f32.gmra.mrb[0].mxu0 %v1115
        %v1252 = vpop.f32.mrb[0].mxu0
        %v1253 = vadd.f32 0.0, %v1252
        %v1254 = vpop.f32.mrb[0].mxu0
        %v1255 = vadd.f32 0.0, %v1254
        %1256 = vmatprep.mubr.f32.mxu0 0.0
        %1257 = vmatmul.mubr.f32.gmra.mrb[0].mxu0 %v1118
        %v1258 = vpop.f32.mrb[0].mxu0
        %v1259 = vadd.f32 0.0, %v1258
        %v1260 = vpop.f32.mrb[0].mxu0
        %v1261 = vadd.f32 0.0, %v1260
        %1262 = vmatprep.mubr.f32.mxu0 0.0
        %1263 = vmatmul.mubr.f32.gmra.mrb[0].mxu0 %v1121
        %v1264 = vpop.f32.mrb[0].mxu0
        %v1265 = vadd.f32 0.0, %v1264
        %v1266 = vpop.f32.mrb[0].mxu0
        %v1267 = vadd.f32 0.0, %v1266
        %1268 = vmatprep.mubr.f32.mxu0 0.0
        %1269 = vmatmul.mubr.f32.gmra.mrb[0].mxu0 %v1124
        %v1270 = vpop.f32.mrb[0].mxu0
        %v1271 = vadd.f32 0.0, %v1270
        %v1272 = vpop.f32.mrb[0].mxu0
        %v1273 = vadd.f32 0.0, %v1272
        %1274 = vmatprep.mubr.f32.mxu0 0.0
        %1275 = vmatmul.mubr.f32.gmra.mrb[0].mxu0 %v1127
        %v1276 = vpop.f32.mrb[0].mxu0
        %v1277 = vadd.f32 0.0, %v1276
        %v1278 = vpop.f32.mrb[0].mxu0
        %v1279 = vadd.f32 0.0, %v1278
        %1280 = vmatprep.mubr.f32.mxu0 0.0
        %1281 = vmatmul.mubr.f32.gmra.mrb[0].mxu0 %v1130
        %v1282 = vpop.f32.mrb[0].mxu0
        %v1283 = vadd.f32 0.0, %v1282
        %v1284 = vpop.f32.mrb[0].mxu0
        %v1285 = vadd.f32 0.0, %v1284
        %1286 = vmatprep.mubr.f32.mxu0 0.0
        %1287 = vmatmul.mubr.f32.gmra.mrb[0].mxu0 %v1133
        %v1288 = vpop.f32.mrb[0].mxu0
        %v1289 = vadd.f32 0.0, %v1288
        %v1290 = vpop.f32.mrb[0].mxu0
        %v1291 = vadd.f32 0.0, %v1290
        %1292 = vmatprep.mubr.f32.mxu0 0.0
        %1293 = vmatmul.mubr.f32.gmra.mrb[0].mxu0 %v1136
        %v1294 = vpop.f32.mrb[0].mxu0
        %v1295 = vadd.f32 0.0, %v1294
        %v1296 = vpop.f32.mrb[0].mxu0
        %v1297 = vadd.f32 0.0, %v1296
        %1298 = vdwg.mxu0
        %1299 = vxpose.xlu0.b32.start [1/16] %v390, 128
        %1300 = vxpose.xlu0.b32.cont [2/16] 0.0, 128
        %1301 = vxpose.xlu0.b32.cont [3/16] 0.0, 128
        %1302 = vxpose.xlu0.b32.cont [4/16] 0.0, 128
        %1303 = vxpose.xlu0.b32.cont [5/16] 0.0, 128
        %1304 = vxpose.xlu0.b32.cont [6/16] 0.0, 128
        %1305 = vxpose.xlu0.b32.cont [7/16] 0.0, 128
        %1306 = vxpose.xlu0.b32.cont [8/16] 0.0, 128
        %1307 = vxpose.xlu0.b32.cont [9/16] 0.0, 128
        %1308 = vxpose.xlu0.b32.cont [10/16] 0.0, 128
        %1309 = vxpose.xlu0.b32.cont [11/16] 0.0, 128
        %1310 = vxpose.xlu0.b32.cont [12/16] 0.0, 128
        %1311 = vxpose.xlu0.b32.cont [13/16] 0.0, 128
        %1312 = vxpose.xlu0.b32.cont [14/16] 0.0, 128
        %1313 = vxpose.xlu0.b32.cont [15/16] 0.0, 128
        %1314 = vxpose.xlu0.b32.end [16/16] 0.0, 128
        %v1315 = vpop.trf.xlu0
        %v1316 = vpop.trf.xlu0
        %v1317 = vpop.trf.xlu0
        %v1318 = vpop.trf.xlu0
        %v1319 = vpop.trf.xlu0
        %v1320 = vpop.trf.xlu0
        %v1321 = vpop.trf.xlu0
        %v1322 = vpop.trf.xlu0
        %v1323 = vpop.trf.xlu0
        %v1324 = vpop.trf.xlu0
        %v1325 = vpop.trf.xlu0
        %v1326 = vpop.trf.xlu0
        %v1327 = vpop.trf.xlu0
        %v1328 = vpop.trf.xlu0
        %v1329 = vpop.trf.xlu0
        %v1330 = vpop.trf.xlu0
        %v1332 = vsel %vm314, %v1315, 0
        %v1335 = vsel %vm314, %v1316, 0
        %v1338 = vsel %vm314, %v1317, 0
        %v1341 = vsel %vm314, %v1318, 0
        %v1344 = vsel %vm314, %v1319, 0
        %v1347 = vsel %vm314, %v1320, 0
        %v1350 = vsel %vm314, %v1321, 0
        %v1353 = vsel %vm314, %v1322, 0
        %v1356 = vsel %vm314, %v1323, 0
        %v1359 = vsel %vm314, %v1324, 0
        %v1362 = vsel %vm314, %v1325, 0
        %v1365 = vsel %vm314, %v1326, 0
        %v1368 = vsel %vm314, %v1327, 0
        %v1371 = vsel %vm314, %v1328, 0
        %v1374 = vsel %vm314, %v1329, 0
        %v1377 = vsel %vm314, %v1330, 0
        %1379 = vmatprep.subr.mxu0 %v467
        %1380 = vmatpush1.msra.mxu0 %v466
        %1381 = vmatprep.subr.mxu0 0.0
        %1382 = vmatpush1.msra.mxu0 0.0
        %1383 = vmatprep.subr.mxu0 0.0
        %1384 = vmatpush1.msra.mxu0 0.0
        %1385 = vmatprep.subr.mxu0 0.0
        %1386 = vmatpush1.msra.mxu0 0.0
        %1387 = vmatprep.subr.mxu0 0.0
        %1388 = vmatpush1.msra.mxu0 0.0
        %1389 = vmatprep.subr.mxu0 0.0
        %1390 = vmatpush1.msra.mxu0 0.0
        %1391 = vmatprep.subr.mxu0 0.0
        %1392 = vmatpush1.msra.mxu0 0.0
        %1393 = vmatprep.subr.mxu0 0.0
        %1394 = vmatpush1.msra.mxu0 0.0
        %1395 = vmatprep.subr.mxu0 0.0
        %1396 = vmatpush1.msra.mxu0 0.0
        %1397 = vmatprep.subr.mxu0 0.0
        %1398 = vmatpush1.msra.mxu0 0.0
        %1399 = vmatprep.subr.mxu0 0.0
        %1400 = vmatpush1.msra.mxu0 0.0
        %1401 = vmatprep.subr.mxu0 0.0
        %1402 = vmatpush1.msra.mxu0 0.0
        %1403 = vmatprep.subr.mxu0 0.0
        %1404 = vmatpush1.msra.mxu0 0.0
        %1405 = vmatprep.subr.mxu0 0.0
        %1406 = vmatpush1.msra.mxu0 0.0
        %1407 = vmatprep.subr.mxu0 0.0
        %1408 = vmatpush1.msra.mxu0 0.0
        %1409 = vmatprep.subr.mxu0 0.0
        %1410 = vmatpush1.msra.mxu0 0.0
        %1411 = vmatprep.subr.mxu0 0.0
        %1412 = vmatpush1.msra.mxu0 0.0
        %1413 = vmatprep.subr.mxu0 0.0
        %1414 = vmatpush1.msra.mxu0 0.0
        %1415 = vmatprep.subr.mxu0 0.0
        %1416 = vmatpush1.msra.mxu0 0.0
        %1417 = vmatprep.subr.mxu0 0.0
        %1418 = vmatpush1.msra.mxu0 0.0
        %1419 = vmatprep.subr.mxu0 0.0
        %1420 = vmatpush1.msra.mxu0 0.0
        %1421 = vmatprep.subr.mxu0 0.0
        %1422 = vmatpush1.msra.mxu0 0.0
        %1423 = vmatprep.subr.mxu0 0.0
        %1424 = vmatpush1.msra.mxu0 0.0
        %1425 = vmatprep.subr.mxu0 0.0
        %1426 = vmatpush1.msra.mxu0 0.0
        %1427 = vmatprep.subr.mxu0 0.0
        %1428 = vmatpush1.msra.mxu0 0.0
        %1429 = vmatprep.subr.mxu0 0.0
        %1430 = vmatpush1.msra.mxu0 0.0
        %1431 = vmatprep.subr.mxu0 0.0
        %1432 = vmatpush1.msra.mxu0 0.0
        %1433 = vmatprep.subr.mxu0 0.0
        %1434 = vmatpush1.msra.mxu0 0.0
        %1435 = vmatprep.subr.mxu0 0.0
        %1436 = vmatpush1.msra.mxu0 0.0
        %1437 = vmatprep.subr.mxu0 0.0
        %1438 = vmatpush1.msra.mxu0 0.0
        %1439 = vmatprep.subr.mxu0 0.0
        %1440 = vmatpush1.msra.mxu0 0.0
        %1441 = vmatprep.subr.mxu0 0.0
        %1442 = vmatpush1.msra.mxu0 0.0
        %1443 = vmatprep.mubr.f32.mxu0 0.0
        %1444 = vmatmul.mubr.f32.gmra.mrb[0].mxu0 %v1332
        %v1445 = vpop.f32.mrb[0].mxu0
        %v1446 = vadd.f32 %v1205, %v1445
        %v1447 = vpop.f32.mrb[0].mxu0
        %v1448 = vadd.f32 %v1207, %v1447
        %1449 = vmatprep.mubr.f32.mxu0 0.0
        %1450 = vmatmul.mubr.f32.gmra.mrb[0].mxu0 %v1335
        %v1451 = vpop.f32.mrb[0].mxu0
        %v1452 = vadd.f32 %v1211, %v1451
        %v1453 = vpop.f32.mrb[0].mxu0
        %v1454 = vadd.f32 %v1213, %v1453
        %1455 = vmatprep.mubr.f32.mxu0 0.0
        %1456 = vmatmul.mubr.f32.gmra.mrb[0].mxu0 %v1338
        %v1457 = vpop.f32.mrb[0].mxu0
        %v1458 = vadd.f32 %v1217, %v1457
        %v1459 = vpop.f32.mrb[0].mxu0
        %v1460 = vadd.f32 %v1219, %v1459
        %1461 = vmatprep.mubr.f32.mxu0 0.0
        %1462 = vmatmul.mubr.f32.gmra.mrb[0].mxu0 %v1341
        %v1463 = vpop.f32.mrb[0].mxu0
        %v1464 = vadd.f32 %v1223, %v1463
        %v1465 = vpop.f32.mrb[0].mxu0
        %v1466 = vadd.f32 %v1225, %v1465
        %1467 = vmatprep.mubr.f32.mxu0 0.0
        %1468 = vmatmul.mubr.f32.gmra.mrb[0].mxu0 %v1344
        %v1469 = vpop.f32.mrb[0].mxu0
        %v1470 = vadd.f32 %v1229, %v1469
        %v1471 = vpop.f32.mrb[0].mxu0
        %v1472 = vadd.f32 %v1231, %v1471
        %1473 = vmatprep.mubr.f32.mxu0 0.0
        %1474 = vmatmul.mubr.f32.gmra.mrb[0].mxu0 %v1347
        %v1475 = vpop.f32.mrb[0].mxu0
        %v1476 = vadd.f32 %v1235, %v1475
        %v1477 = vpop.f32.mrb[0].mxu0
        %v1478 = vadd.f32 %v1237, %v1477
        %1479 = vmatprep.mubr.f32.mxu0 0.0
        %1480 = vmatmul.mubr.f32.gmra.mrb[0].mxu0 %v1350
        %v1481 = vpop.f32.mrb[0].mxu0
        %v1482 = vadd.f32 %v1241, %v1481
        %v1483 = vpop.f32.mrb[0].mxu0
        %v1484 = vadd.f32 %v1243, %v1483
        %1485 = vmatprep.mubr.f32.mxu0 0.0
        %1486 = vmatmul.mubr.f32.gmra.mrb[0].mxu0 %v1353
        %v1487 = vpop.f32.mrb[0].mxu0
        %v1488 = vadd.f32 %v1247, %v1487
        %v1489 = vpop.f32.mrb[0].mxu0
        %v1490 = vadd.f32 %v1249, %v1489
        %1491 = vmatprep.mubr.f32.mxu0 0.0
        %1492 = vmatmul.mubr.f32.gmra.mrb[0].mxu0 %v1356
        %v1493 = vpop.f32.mrb[0].mxu0
        %v1494 = vadd.f32 %v1253, %v1493
        %v1495 = vpop.f32.mrb[0].mxu0
        %v1496 = vadd.f32 %v1255, %v1495
        %1497 = vmatprep.mubr.f32.mxu0 0.0
        %1498 = vmatmul.mubr.f32.gmra.mrb[0].mxu0 %v1359
        %v1499 = vpop.f32.mrb[0].mxu0
        %v1500 = vadd.f32 %v1259, %v1499
        %v1501 = vpop.f32.mrb[0].mxu0
        %v1502 = vadd.f32 %v1261, %v1501
        %1503 = vmatprep.mubr.f32.mxu0 0.0
        %1504 = vmatmul.mubr.f32.gmra.mrb[0].mxu0 %v1362
        %v1505 = vpop.f32.mrb[0].mxu0
        %v1506 = vadd.f32 %v1265, %v1505
        %v1507 = vpop.f32.mrb[0].mxu0
        %v1508 = vadd.f32 %v1267, %v1507
        %1509 = vmatprep.mubr.f32.mxu0 0.0
        %1510 = vmatmul.mubr.f32.gmra.mrb[0].mxu0 %v1365
        %v1511 = vpop.f32.mrb[0].mxu0
        %v1512 = vadd.f32 %v1271, %v1511
        %v1513 = vpop.f32.mrb[0].mxu0
        %v1514 = vadd.f32 %v1273, %v1513
        %1515 = vmatprep.mubr.f32.mxu0 0.0
        %1516 = vmatmul.mubr.f32.gmra.mrb[0].mxu0 %v1368
        %v1517 = vpop.f32.mrb[0].mxu0
        %v1518 = vadd.f32 %v1277, %v1517
        %v1519 = vpop.f32.mrb[0].mxu0
        %v1520 = vadd.f32 %v1279, %v1519
        %1521 = vmatprep.mubr.f32.mxu0 0.0
        %1522 = vmatmul.mubr.f32.gmra.mrb[0].mxu0 %v1371
        %v1523 = vpop.f32.mrb[0].mxu0
        %v1524 = vadd.f32 %v1283, %v1523
        %v1525 = vpop.f32.mrb[0].mxu0
        %v1526 = vadd.f32 %v1285, %v1525
        %1527 = vmatprep.mubr.f32.mxu0 0.0
        %1528 = vmatmul.mubr.f32.gmra.mrb[0].mxu0 %v1374
        %v1529 = vpop.f32.mrb[0].mxu0
        %v1530 = vadd.f32 %v1289, %v1529
        %v1531 = vpop.f32.mrb[0].mxu0
        %v1532 = vadd.f32 %v1291, %v1531
        %1533 = vmatprep.mubr.f32.mxu0 0.0
        %1534 = vmatmul.mubr.f32.gmra.mrb[0].mxu0 %v1377
        %v1535 = vpop.f32.mrb[0].mxu0
        %v1536 = vadd.f32 %v1295, %v1535
        %v1537 = vpop.f32.mrb[0].mxu0
        %v1538 = vadd.f32 %v1297, %v1537
        %1539 = vdwg.mxu0
        %v1540 = vmul.f32 %v1446, 0.5
        %v1541 = vmul.f32 %v1448, 0.5
        %v1542 = vmul.f32 %v1452, 0.5
        %v1543 = vmul.f32 %v1454, 0.5
        %v1544 = vmul.f32 %v1458, 0.5
        %v1545 = vmul.f32 %v1460, 0.5
        %v1546 = vmul.f32 %v1464, 0.5
        %v1547 = vmul.f32 %v1466, 0.5
        %v1548 = vmul.f32 %v1470, 0.5
        %v1549 = vmul.f32 %v1472, 0.5
        %v1550 = vmul.f32 %v1476, 0.5
        %v1551 = vmul.f32 %v1478, 0.5
        %v1552 = vmul.f32 %v1482, 0.5
        %v1553 = vmul.f32 %v1484, 0.5
        %v1554 = vmul.f32 %v1488, 0.5
        %v1555 = vmul.f32 %v1490, 0.5
        %v1556 = vmul.f32 %v1494, 0.5
        %v1557 = vmul.f32 %v1496, 0.5
        %v1558 = vmul.f32 %v1500, 0.5
        %v1559 = vmul.f32 %v1502, 0.5
        %v1560 = vmul.f32 %v1506, 0.5
        %v1561 = vmul.f32 %v1508, 0.5
        %v1562 = vmul.f32 %v1512, 0.5
        %v1563 = vmul.f32 %v1514, 0.5
        %v1564 = vmul.f32 %v1518, 0.5
        %v1565 = vmul.f32 %v1520, 0.5
        %v1566 = vmul.f32 %v1524, 0.5
        %v1567 = vmul.f32 %v1526, 0.5
        %v1568 = vmul.f32 %v1530, 0.5
        %v1569 = vmul.f32 %v1532, 0.5
        %v1570 = vmul.f32 %v1536, 0.5
        %v1571 = vmul.f32 %v1538, 0.5
        %v1572 = vadd.f32 %v1540, %v1542
        %v1573 = vadd.f32 %v1572, %v1544
        %v1574 = vadd.f32 %v1573, %v1546
        %v1575 = vadd.f32 %v1574, %v1548
        %v1576 = vadd.f32 %v1575, %v1550
        %v1577 = vadd.f32 %v1576, %v1552
        %v1578 = vadd.f32 %v1577, %v1554
        %v1579 = vadd.f32 %v1578, %v1556
        %v1580 = vadd.f32 %v1579, %v1558
        %v1581 = vadd.f32 %v1580, %v1560
        %v1582 = vadd.f32 %v1581, %v1562
        %v1583 = vadd.f32 %v1582, %v1564
        %v1584 = vadd.f32 %v1583, %v1566
        %v1585 = vadd.f32 %v1584, %v1568
        %v1586 = vadd.f32 %v1585, %v1570
        %v1587 = vrot.slane %v1586, 4
        %v1588 = vadd.f32 %v1586, %v1587
        %v1589 = vrot.slane %v1588, 2
        %v1590 = vadd.f32 %v1588, %v1589
        %v1591 = vrot.slane %v1590, 1
        %v1592 = vadd.f32 %v1590, %v1591
        %v1593 = vadd.f32 %v1541, %v1543
        %v1594 = vadd.f32 %v1593, %v1545
        %v1595 = vadd.f32 %v1594, %v1547
        %v1596 = vadd.f32 %v1595, %v1549
        %v1597 = vadd.f32 %v1596, %v1551
        %v1598 = vadd.f32 %v1597, %v1553
        %v1599 = vadd.f32 %v1598, %v1555
        %v1600 = vadd.f32 %v1599, %v1557
        %v1601 = vadd.f32 %v1600, %v1559
        %v1602 = vadd.f32 %v1601, %v1561
        %v1603 = vadd.f32 %v1602, %v1563
        %v1604 = vadd.f32 %v1603, %v1565
        %v1605 = vadd.f32 %v1604, %v1567
        %v1606 = vadd.f32 %v1605, %v1569
        %v1607 = vadd.f32 %v1606, %v1571
        %v1608 = vrot.slane %v1607, 4
        %v1609 = vadd.f32 %v1607, %v1608
        %v1610 = vrot.slane %v1609, 2
        %v1611 = vadd.f32 %v1609, %v1610
        %v1612 = vrot.slane %v1611, 1
        %v1613 = vadd.f32 %v1611, %v1612
        %v1614 = vadd.f32 %v1024, %v1592
        %v1615 = vadd.f32 %v1025, %v1613
        %v1616 = vpack.c.bf16 %v1542, %v1540
        %v1617 = vpack.c.bf16 %v1543, %v1541
        %v1618 = vpack.c.bf16 %v1546, %v1544
        %v1619 = vpack.c.bf16 %v1547, %v1545
        %v1620 = vpack.c.bf16 %v1550, %v1548
        %v1621 = vpack.c.bf16 %v1551, %v1549
        %v1622 = vpack.c.bf16 %v1554, %v1552
        %v1623 = vpack.c.bf16 %v1555, %v1553
        %v1624 = vpack.c.bf16 %v1558, %v1556
        %v1625 = vpack.c.bf16 %v1559, %v1557
        %v1626 = vpack.c.bf16 %v1562, %v1560
        %v1627 = vpack.c.bf16 %v1563, %v1561
        %v1628 = vpack.c.bf16 %v1566, %v1564
        %v1629 = vpack.c.bf16 %v1567, %v1565
        %v1630 = vpack.c.bf16 %v1570, %v1568
        %v1631 = vpack.c.bf16 %v1571, %v1569
        %1632 = vst [vmem:[#allocation2 + $0x80] sm:$0xff] %v1616
        %1633 = vst [vmem:[#allocation2 + $0x88] sm:$0xff] %v1617
        %1634 = vst [vmem:[#allocation2 + $0x90] sm:$0xff] %v1618
        %1635 = vst [vmem:[#allocation2 + $0x98] sm:$0xff] %v1619
        %1636 = vst [vmem:[#allocation2 + $0xa0] sm:$0xff] %v1620
        %1637 = vst [vmem:[#allocation2 + $0xa8] sm:$0xff] %v1621
        %1638 = vst [vmem:[#allocation2 + $0xb0] sm:$0xff] %v1622
        %1639 = vst [vmem:[#allocation2 + $0xb8] sm:$0xff] %v1623
        %1640 = vst [vmem:[#allocation2 + $0xc0] sm:$0xff] %v1624
        %1641 = vst [vmem:[#allocation2 + $0xc8] sm:$0xff] %v1625
        %1642 = vst [vmem:[#allocation2 + $0xd0] sm:$0xff] %v1626
        %1643 = vst [vmem:[#allocation2 + $0xd8] sm:$0xff] %v1627
        %1644 = vst [vmem:[#allocation2 + $0xe0] sm:$0xff] %v1628
        %1645 = vst [vmem:[#allocation2 + $0xe8] sm:$0xff] %v1629
        %1646 = vst [vmem:[#allocation2 + $0xf0] sm:$0xff] %v1630
        %1647 = vst [vmem:[#allocation2 + $0xf8] sm:$0xff] %v1631
        %vm1648 = vcmp.ne.f32.partialorder %v1614, 0.0
        %vm1649 = vcmp.ne.f32.partialorder %v1615, 0.0
        %v1650 = vsel %vm1648, %v1614, 1.0
        %v1651 = vsel %vm1649, %v1615, 1.0
        %v1652 = vrsqrt.pop %v1650
        %v1653 = vrsqrt.pop %v1651
        %v1654 = vsel %vm1648, %v1652, 0.0
        %v1655 = vsel %vm1649, %v1653, 0.0
        %v1656 = vld [vmem:[#allocation9] sm:$0xff]
        %v1657 = vld [vmem:[#allocation9 + $0x8] sm:$0xff]
        %vm1658 = vcmask 261120
        %v1660 = vsel %vm1658, %v1656, 0
        %v1663 = vsel %vm1658, %v1657, 0
        %1665 = vmatprep.subr.mxu0 %v298
        %1666 = vmatpush1.msra.mxu0 %v297
        %1667 = vmatprep.subr.mxu0 %v300
        %1668 = vmatpush1.msra.mxu0 %v299
        %1669 = vmatprep.subr.mxu0 %v302
        %1670 = vmatpush1.msra.mxu0 %v301
        %1671 = vmatprep.subr.mxu0 %v304
        %1672 = vmatpush1.msra.mxu0 %v303
        %1673 = vmatprep.subr.mxu0 0.0
        %1674 = vmatpush1.msra.mxu0 0.0
        %1675 = vmatprep.subr.mxu0 0.0
        %1676 = vmatpush1.msra.mxu0 0.0
        %1677 = vmatprep.subr.mxu0 0.0
        %1678 = vmatpush1.msra.mxu0 0.0
        %1679 = vmatprep.subr.mxu0 0.0
        %1680 = vmatpush1.msra.mxu0 0.0
        %1681 = vmatprep.subr.mxu0 0.0
        %1682 = vmatpush1.msra.mxu0 0.0
        %1683 = vmatprep.subr.mxu0 0.0
        %1684 = vmatpush1.msra.mxu0 0.0
        %1685 = vmatprep.subr.mxu0 0.0
        %1686 = vmatpush1.msra.mxu0 0.0
        %1687 = vmatprep.subr.mxu0 0.0
        %1688 = vmatpush1.msra.mxu0 0.0
        %1689 = vmatprep.subr.mxu0 0.0
        %1690 = vmatpush1.msra.mxu0 0.0
        %1691 = vmatprep.subr.mxu0 0.0
        %1692 = vmatpush1.msra.mxu0 0.0
        %1693 = vmatprep.subr.mxu0 0.0
        %1694 = vmatpush1.msra.mxu0 0.0
        %1695 = vmatprep.subr.mxu0 0.0
        %1696 = vmatpush1.msra.mxu0 0.0
        %1697 = vmatprep.subr.mxu0 0.0
        %1698 = vmatpush1.msra.mxu0 0.0
        %1699 = vmatprep.subr.mxu0 0.0
        %1700 = vmatpush1.msra.mxu0 0.0
        %1701 = vmatprep.subr.mxu0 0.0
        %1702 = vmatpush1.msra.mxu0 0.0
        %1703 = vmatprep.subr.mxu0 0.0
        %1704 = vmatpush1.msra.mxu0 0.0
        %1705 = vmatprep.subr.mxu0 0.0
        %1706 = vmatpush1.msra.mxu0 0.0
        %1707 = vmatprep.subr.mxu0 0.0
        %1708 = vmatpush1.msra.mxu0 0.0
        %1709 = vmatprep.subr.mxu0 0.0
        %1710 = vmatpush1.msra.mxu0 0.0
        %1711 = vmatprep.subr.mxu0 0.0
        %1712 = vmatpush1.msra.mxu0 0.0
        %1713 = vmatprep.subr.mxu0 0.0
        %1714 = vmatpush1.msra.mxu0 0.0
        %1715 = vmatprep.subr.mxu0 0.0
        %1716 = vmatpush1.msra.mxu0 0.0
        %1717 = vmatprep.subr.mxu0 0.0
        %1718 = vmatpush1.msra.mxu0 0.0
        %1719 = vmatprep.subr.mxu0 0.0
        %1720 = vmatpush1.msra.mxu0 0.0
        %1721 = vmatprep.subr.mxu0 0.0
        %1722 = vmatpush1.msra.mxu0 0.0
        %1723 = vmatprep.subr.mxu0 0.0
        %1724 = vmatpush1.msra.mxu0 0.0
        %1725 = vmatprep.subr.mxu0 0.0
        %1726 = vmatpush1.msra.mxu0 0.0
        %1727 = vmatprep.subr.mxu0 0.0
        %1728 = vmatpush1.msra.mxu0 0.0
        %1729 = vmatprep.mubr.f32.mxu0 0.0
        %1730 = vmatmul.mubr.f32.gmra.mrb[0].mxu0 %v1660
        %v1731 = vpop.f32.mrb[0].mxu0
        %v1732 = vadd.f32 0.0, %v1731
        %v1733 = vpop.f32.mrb[0].mxu0
        %v1734 = vadd.f32 0.0, %v1733
        %1735 = vmatprep.mubr.f32.mxu0 0.0
        %1736 = vmatmul.mubr.f32.gmra.mrb[0].mxu0 %v1663
        %v1737 = vpop.f32.mrb[0].mxu0
        %v1738 = vadd.f32 0.0, %v1737
        %v1739 = vpop.f32.mrb[0].mxu0
        %v1740 = vadd.f32 0.0, %v1739
        %1741 = vdwg.mxu0
        %v1742 = vmul.f32 %v1732, %v1654
        %v1743 = vmul.f32 %v1734, %v1655
        %v1744 = vmul.f32 %v1738, %v1654
        %v1745 = vmul.f32 %v1740, %v1655
        %v1746 = vpack.c.bf16 %v1744, %v1742
        %v1747 = vpack.c.bf16 %v1745, %v1743
        %v1748 = vld [vmem:[#allocation2] sm:$0xff]
        %v1749 = vld [vmem:[#allocation2 + $0x8] sm:$0xff]
        %v1750 = vld [vmem:[#allocation2 + $0x10] sm:$0xff]
        %v1751 = vld [vmem:[#allocation2 + $0x18] sm:$0xff]
        %v1752 = vld [vmem:[#allocation2 + $0x20] sm:$0xff]
        %v1753 = vld [vmem:[#allocation2 + $0x28] sm:$0xff]
        %v1754 = vld [vmem:[#allocation2 + $0x30] sm:$0xff]
        %v1755 = vld [vmem:[#allocation2 + $0x38] sm:$0xff]
        %v1756 = vld [vmem:[#allocation2 + $0x40] sm:$0xff]
        %v1757 = vld [vmem:[#allocation2 + $0x48] sm:$0xff]
        %v1758 = vld [vmem:[#allocation2 + $0x50] sm:$0xff]
        %v1759 = vld [vmem:[#allocation2 + $0x58] sm:$0xff]
        %v1760 = vld [vmem:[#allocation2 + $0x60] sm:$0xff]
        %v1761 = vld [vmem:[#allocation2 + $0x68] sm:$0xff]
        %v1762 = vld [vmem:[#allocation2 + $0x70] sm:$0xff]
        %v1763 = vld [vmem:[#allocation2 + $0x78] sm:$0xff]
        %v1764 = vld [vmem:[#allocation2 + $0x80] sm:$0xff]
        %v1765 = vld [vmem:[#allocation2 + $0x88] sm:$0xff]
        %v1766 = vld [vmem:[#allocation2 + $0x90] sm:$0xff]
        %v1767 = vld [vmem:[#allocation2 + $0x98] sm:$0xff]
        %v1768 = vld [vmem:[#allocation2 + $0xa0] sm:$0xff]
        %v1769 = vld [vmem:[#allocation2 + $0xa8] sm:$0xff]
        %v1770 = vld [vmem:[#allocation2 + $0xb0] sm:$0xff]
        %v1771 = vld [vmem:[#allocation2 + $0xb8] sm:$0xff]
        %v1772 = vld [vmem:[#allocation2 + $0xc0] sm:$0xff]
        %v1773 = vld [vmem:[#allocation2 + $0xc8] sm:$0xff]
        %v1774 = vld [vmem:[#allocation2 + $0xd0] sm:$0xff]
        %v1775 = vld [vmem:[#allocation2 + $0xd8] sm:$0xff]
        %v1776 = vld [vmem:[#allocation2 + $0xe0] sm:$0xff]
        %v1777 = vld [vmem:[#allocation2 + $0xe8] sm:$0xff]
        %v1778 = vld [vmem:[#allocation2 + $0xf0] sm:$0xff]
        %v1779 = vld [vmem:[#allocation2 + $0xf8] sm:$0xff]
        %1780 = vmatprep.subr.bf16.mxu0 %v1749
        %1781 = vmatpush1.bf16.msra.mxu0 %v1748
        %1782 = vmatprep.subr.bf16.mxu0 %v1751
        %1783 = vmatpush1.bf16.msra.mxu0 %v1750
        %1784 = vmatprep.subr.bf16.mxu0 %v1753
        %1785 = vmatpush1.bf16.msra.mxu0 %v1752
        %1786 = vmatprep.subr.bf16.mxu0 %v1755
        %1787 = vmatpush1.bf16.msra.mxu0 %v1754
        %1788 = vmatprep.subr.bf16.mxu0 %v1757
        %1789 = vmatpush1.bf16.msra.mxu0 %v1756
        %1790 = vmatprep.subr.bf16.mxu0 %v1759
        %1791 = vmatpush1.bf16.msra.mxu0 %v1758
        %1792 = vmatprep.subr.bf16.mxu0 %v1761
        %1793 = vmatpush1.bf16.msra.mxu0 %v1760
        %1794 = vmatprep.subr.bf16.mxu0 %v1763
        %1795 = vmatpush1.bf16.msra.mxu0 %v1762
        %1796 = vmatprep.subr.bf16.mxu0 %v1765
        %1797 = vmatpush1.bf16.msra.mxu0 %v1764
        %1798 = vmatprep.subr.bf16.mxu0 %v1767
        %1799 = vmatpush1.bf16.msra.mxu0 %v1766
        %1800 = vmatprep.subr.bf16.mxu0 %v1769
        %1801 = vmatpush1.bf16.msra.mxu0 %v1768
        %1802 = vmatprep.subr.bf16.mxu0 %v1771
        %1803 = vmatpush1.bf16.msra.mxu0 %v1770
        %1804 = vmatprep.subr.bf16.mxu0 %v1773
        %1805 = vmatpush1.bf16.msra.mxu0 %v1772
        %1806 = vmatprep.subr.bf16.mxu0 %v1775
        %1807 = vmatpush1.bf16.msra.mxu0 %v1774
        %1808 = vmatprep.subr.bf16.mxu0 %v1777
        %1809 = vmatpush1.bf16.msra.mxu0 %v1776
        %1810 = vmatprep.subr.bf16.mxu0 %v1779
        %1811 = vmatpush1.bf16.msra.mxu0 %v1778
        %1812 = vmatprep.mubr.bf16.mxu0 %v1747
        %1813 = vmatmul.mubr.bf16.gmra.mrb[0].mxu0 %v1746
        %v1814 = vpop.f32.mrb[0].mxu0
        %v1815 = vadd.f32 0.0, %v1814
        %v1816 = vpop.f32.mrb[0].mxu0
        %v1817 = vadd.f32 0.0, %v1816
        %v1818 = vpop.f32.mrb[0].mxu0
        %v1819 = vadd.f32 0.0, %v1818
        %v1820 = vpop.f32.mrb[0].mxu0
        %v1821 = vadd.f32 0.0, %v1820
        %1822 = vdwg.mxu0
        %v1823 = vmul.f32 %v1815, %v1654
        %v1824 = vmul.f32 %v1817, %v1655
        %v1825 = vmul.f32 %v1819, %v1654
        %v1826 = vmul.f32 %v1821, %v1655
        %v1827 = vld [vmem:[#allocation11] sm:$0xff]
        %v1828 = vld [vmem:[#allocation11 + $0x8] sm:$0xff]
        %v1829 = vld [vmem:[#allocation11 + $0x10] sm:$0xff]
        %v1830 = vld [vmem:[#allocation11 + $0x18] sm:$0xff]
        %v1832 = vsel %vm1658, %v1827, 0
        %v1835 = vsel %vm1658, %v1828, 0
        %v1838 = vsel %vm1658, %v1829, 0
        %v1841 = vsel %vm1658, %v1830, 0
        %1843 = vmatprep.subr.mxu0 %v1734
        %1844 = vmatpush1.msra.mxu0 %v1732
        %1845 = vmatprep.subr.mxu0 %v1740
        %1846 = vmatpush1.msra.mxu0 %v1738
        %1847 = vmatprep.subr.mxu0 %v1824
        %1848 = vmatpush1.msra.mxu0 %v1823
        %1849 = vmatprep.subr.mxu0 %v1826
        %1850 = vmatpush1.msra.mxu0 %v1825
        %1851 = vmatprep.subr.mxu0 0.0
        %1852 = vmatpush1.msra.mxu0 0.0
        %1853 = vmatprep.subr.mxu0 0.0
        %1854 = vmatpush1.msra.mxu0 0.0
        %1855 = vmatprep.subr.mxu0 0.0
        %1856 = vmatpush1.msra.mxu0 0.0
        %1857 = vmatprep.subr.mxu0 0.0
        %1858 = vmatpush1.msra.mxu0 0.0
        %1859 = vmatprep.subr.mxu0 0.0
        %1860 = vmatpush1.msra.mxu0 0.0
        %1861 = vmatprep.subr.mxu0 0.0
        %1862 = vmatpush1.msra.mxu0 0.0
        %1863 = vmatprep.subr.mxu0 0.0
        %1864 = vmatpush1.msra.mxu0 0.0
        %1865 = vmatprep.subr.mxu0 0.0
        %1866 = vmatpush1.msra.mxu0 0.0
        %1867 = vmatprep.subr.mxu0 0.0
        %1868 = vmatpush1.msra.mxu0 0.0
        %1869 = vmatprep.subr.mxu0 0.0
        %1870 = vmatpush1.msra.mxu0 0.0
        %1871 = vmatprep.subr.mxu0 0.0
        %1872 = vmatpush1.msra.mxu0 0.0
        %1873 = vmatprep.subr.mxu0 0.0
        %1874 = vmatpush1.msra.mxu0 0.0
        %1875 = vmatprep.subr.mxu0 0.0
        %1876 = vmatpush1.msra.mxu0 0.0
        %1877 = vmatprep.subr.mxu0 0.0
        %1878 = vmatpush1.msra.mxu0 0.0
        %1879 = vmatprep.subr.mxu0 0.0
        %1880 = vmatpush1.msra.mxu0 0.0
        %1881 = vmatprep.subr.mxu0 0.0
        %1882 = vmatpush1.msra.mxu0 0.0
        %1883 = vmatprep.subr.mxu0 0.0
        %1884 = vmatpush1.msra.mxu0 0.0
        %1885 = vmatprep.subr.mxu0 0.0
        %1886 = vmatpush1.msra.mxu0 0.0
        %1887 = vmatprep.subr.mxu0 0.0
        %1888 = vmatpush1.msra.mxu0 0.0
        %1889 = vmatprep.subr.mxu0 0.0
        %1890 = vmatpush1.msra.mxu0 0.0
        %1891 = vmatprep.subr.mxu0 0.0
        %1892 = vmatpush1.msra.mxu0 0.0
        %1893 = vmatprep.subr.mxu0 0.0
        %1894 = vmatpush1.msra.mxu0 0.0
        %1895 = vmatprep.subr.mxu0 0.0
        %1896 = vmatpush1.msra.mxu0 0.0
        %1897 = vmatprep.subr.mxu0 0.0
        %1898 = vmatpush1.msra.mxu0 0.0
        %1899 = vmatprep.subr.mxu0 0.0
        %1900 = vmatpush1.msra.mxu0 0.0
        %1901 = vmatprep.subr.mxu0 0.0
        %1902 = vmatpush1.msra.mxu0 0.0
        %1903 = vmatprep.subr.mxu0 0.0
        %1904 = vmatpush1.msra.mxu0 0.0
        %1905 = vmatprep.subr.mxu0 0.0
        %1906 = vmatpush1.msra.mxu0 0.0
        %1907 = vmatprep.mubr.f32.mxu0 0.0
        %1908 = vmatmul.mubr.f32.gmra.mrb[0].mxu0 %v1832
        %v1909 = vpop.f32.mrb[0].mxu0
        %v1910 = vadd.f32 0.0, %v1909
        %v1911 = vpop.f32.mrb[0].mxu0
        %v1912 = vadd.f32 0.0, %v1911
        %1913 = vmatprep.mubr.f32.mxu0 0.0
        %1914 = vmatmul.mubr.f32.gmra.mrb[0].mxu0 %v1835
        %v1915 = vpop.f32.mrb[0].mxu0
        %v1916 = vadd.f32 0.0, %v1915
        %v1917 = vpop.f32.mrb[0].mxu0
        %v1918 = vadd.f32 0.0, %v1917
        %1919 = vmatprep.mubr.f32.mxu0 0.0
        %1920 = vmatmul.mubr.f32.gmra.mrb[0].mxu0 %v1838
        %v1921 = vpop.f32.mrb[0].mxu0
        %v1922 = vadd.f32 0.0, %v1921
        %v1923 = vpop.f32.mrb[0].mxu0
        %v1924 = vadd.f32 0.0, %v1923
        %1925 = vmatprep.mubr.f32.mxu0 0.0
        %1926 = vmatmul.mubr.f32.gmra.mrb[0].mxu0 %v1841
        %v1927 = vpop.f32.mrb[0].mxu0
        %v1928 = vadd.f32 0.0, %v1927
        %v1929 = vpop.f32.mrb[0].mxu0
        %v1930 = vadd.f32 0.0, %v1929
        %1931 = vdwg.mxu0
        %v1932 = vadd.f32 %v297, %v1910
        %v1933 = vadd.f32 %v298, %v1912
        %v1934 = vadd.f32 %v299, %v1916
        %v1935 = vadd.f32 %v300, %v1918
        %v1936 = vadd.f32 %v301, %v1922
        %v1937 = vadd.f32 %v302, %v1924
        %v1938 = vadd.f32 %v303, %v1928
        %v1939 = vadd.f32 %v304, %v1930
        %s1940 = scalar_lea.vmem [#allocation9], 16
        %v1941 = vld [vmem:[%s1940] sm:$0xff]
        %v1942 = vld [vmem:[%s1940 + $0x8] sm:$0xff]
        %v1944 = vsel %vm1658, %v1941, 0
        %v1947 = vsel %vm1658, %v1942, 0
        %1949 = vmatprep.subr.mxu0 %v1933
        %1950 = vmatpush1.msra.mxu0 %v1932
        %1951 = vmatprep.subr.mxu0 %v1935
        %1952 = vmatpush1.msra.mxu0 %v1934
        %1953 = vmatprep.subr.mxu0 %v1937
        %1954 = vmatpush1.msra.mxu0 %v1936
        %1955 = vmatprep.subr.mxu0 %v1939
        %1956 = vmatpush1.msra.mxu0 %v1938
        %1957 = vmatprep.subr.mxu0 0.0
        %1958 = vmatpush1.msra.mxu0 0.0
        %1959 = vmatprep.subr.mxu0 0.0
        %1960 = vmatpush1.msra.mxu0 0.0
        %1961 = vmatprep.subr.mxu0 0.0
        %1962 = vmatpush1.msra.mxu0 0.0
        %1963 = vmatprep.subr.mxu0 0.0
        %1964 = vmatpush1.msra.mxu0 0.0
        %1965 = vmatprep.subr.mxu0 0.0
        %1966 = vmatpush1.msra.mxu0 0.0
        %1967 = vmatprep.subr.mxu0 0.0
        %1968 = vmatpush1.msra.mxu0 0.0
        %1969 = vmatprep.subr.mxu0 0.0
        %1970 = vmatpush1.msra.mxu0 0.0
        %1971 = vmatprep.subr.mxu0 0.0
        %1972 = vmatpush1.msra.mxu0 0.0
        %1973 = vmatprep.subr.mxu0 0.0
        %1974 = vmatpush1.msra.mxu0 0.0
        %1975 = vmatprep.subr.mxu0 0.0
        %1976 = vmatpush1.msra.mxu0 0.0
        %1977 = vmatprep.subr.mxu0 0.0
        %1978 = vmatpush1.msra.mxu0 0.0
        %1979 = vmatprep.subr.mxu0 0.0
        %1980 = vmatpush1.msra.mxu0 0.0
        %1981 = vmatprep.subr.mxu0 0.0
        %1982 = vmatpush1.msra.mxu0 0.0
        %1983 = vmatprep.subr.mxu0 0.0
        %1984 = vmatpush1.msra.mxu0 0.0
        %1985 = vmatprep.subr.mxu0 0.0
        %1986 = vmatpush1.msra.mxu0 0.0
        %1987 = vmatprep.subr.mxu0 0.0
        %1988 = vmatpush1.msra.mxu0 0.0
        %1989 = vmatprep.subr.mxu0 0.0
        %1990 = vmatpush1.msra.mxu0 0.0
        %1991 = vmatprep.subr.mxu0 0.0
        %1992 = vmatpush1.msra.mxu0 0.0
        %1993 = vmatprep.subr.mxu0 0.0
        %1994 = vmatpush1.msra.mxu0 0.0
        %1995 = vmatprep.subr.mxu0 0.0
        %1996 = vmatpush1.msra.mxu0 0.0
        %1997 = vmatprep.subr.mxu0 0.0
        %1998 = vmatpush1.msra.mxu0 0.0
        %1999 = vmatprep.subr.mxu0 0.0
        %2000 = vmatpush1.msra.mxu0 0.0
        %2001 = vmatprep.subr.mxu0 0.0
        %2002 = vmatpush1.msra.mxu0 0.0
        %2003 = vmatprep.subr.mxu0 0.0
        %2004 = vmatpush1.msra.mxu0 0.0
        %2005 = vmatprep.subr.mxu0 0.0
        %2006 = vmatpush1.msra.mxu0 0.0
        %2007 = vmatprep.subr.mxu0 0.0
        %2008 = vmatpush1.msra.mxu0 0.0
        %2009 = vmatprep.subr.mxu0 0.0
        %2010 = vmatpush1.msra.mxu0 0.0
        %2011 = vmatprep.subr.mxu0 0.0
        %2012 = vmatpush1.msra.mxu0 0.0
        %2013 = vmatprep.mubr.f32.mxu0 0.0
        %2014 = vmatmul.mubr.f32.gmra.mrb[0].mxu0 %v1944
        %v2015 = vpop.f32.mrb[0].mxu0
        %v2016 = vadd.f32 0.0, %v2015
        %v2017 = vpop.f32.mrb[0].mxu0
        %v2018 = vadd.f32 0.0, %v2017
        %2019 = vmatprep.mubr.f32.mxu0 0.0
        %2020 = vmatmul.mubr.f32.gmra.mrb[0].mxu0 %v1947
        %v2021 = vpop.f32.mrb[0].mxu0
        %v2022 = vadd.f32 0.0, %v2021
        %v2023 = vpop.f32.mrb[0].mxu0
        %v2024 = vadd.f32 0.0, %v2023
        %2025 = vdwg.mxu0
        %v2026 = vmul.f32 %v2016, %v1654
        %v2027 = vmul.f32 %v2018, %v1655
        %v2028 = vmul.f32 %v2022, %v1654
        %v2029 = vmul.f32 %v2024, %v1655
        %v2030 = vpack.c.bf16 %v2028, %v2026
        %v2031 = vpack.c.bf16 %v2029, %v2027
        %2032 = vmatprep.subr.bf16.mxu0 %v1749
        %2033 = vmatpush1.bf16.msra.mxu0 %v1748
        %2034 = vmatprep.subr.bf16.mxu0 %v1751
        %2035 = vmatpush1.bf16.msra.mxu0 %v1750
        %2036 = vmatprep.subr.bf16.mxu0 %v1753
        %2037 = vmatpush1.bf16.msra.mxu0 %v1752
        %2038 = vmatprep.subr.bf16.mxu0 %v1755
        %2039 = vmatpush1.bf16.msra.mxu0 %v1754
        %2040 = vmatprep.subr.bf16.mxu0 %v1757
        %2041 = vmatpush1.bf16.msra.mxu0 %v1756
        %2042 = vmatprep.subr.bf16.mxu0 %v1759
        %2043 = vmatpush1.bf16.msra.mxu0 %v1758
        %2044 = vmatprep.subr.bf16.mxu0 %v1761
        %2045 = vmatpush1.bf16.msra.mxu0 %v1760
        %2046 = vmatprep.subr.bf16.mxu0 %v1763
        %2047 = vmatpush1.bf16.msra.mxu0 %v1762
        %2048 = vmatprep.subr.bf16.mxu0 %v1765
        %2049 = vmatpush1.bf16.msra.mxu0 %v1764
        %2050 = vmatprep.subr.bf16.mxu0 %v1767
        %2051 = vmatpush1.bf16.msra.mxu0 %v1766
        %2052 = vmatprep.subr.bf16.mxu0 %v1769
        %2053 = vmatpush1.bf16.msra.mxu0 %v1768
        %2054 = vmatprep.subr.bf16.mxu0 %v1771
        %2055 = vmatpush1.bf16.msra.mxu0 %v1770
        %2056 = vmatprep.subr.bf16.mxu0 %v1773
        %2057 = vmatpush1.bf16.msra.mxu0 %v1772
        %2058 = vmatprep.subr.bf16.mxu0 %v1775
        %2059 = vmatpush1.bf16.msra.mxu0 %v1774
        %2060 = vmatprep.subr.bf16.mxu0 %v1777
        %2061 = vmatpush1.bf16.msra.mxu0 %v1776
        %2062 = vmatprep.subr.bf16.mxu0 %v1779
        %2063 = vmatpush1.bf16.msra.mxu0 %v1778
        %2064 = vmatprep.mubr.bf16.mxu0 %v2031
        %2065 = vmatmul.mubr.bf16.gmra.mrb[0].mxu0 %v2030
        %v2066 = vpop.f32.mrb[0].mxu0
        %v2067 = vadd.f32 0.0, %v2066
        %v2068 = vpop.f32.mrb[0].mxu0
        %v2069 = vadd.f32 0.0, %v2068
        %v2070 = vpop.f32.mrb[0].mxu0
        %v2071 = vadd.f32 0.0, %v2070
        %v2072 = vpop.f32.mrb[0].mxu0
        %v2073 = vadd.f32 0.0, %v2072
        %2074 = vdwg.mxu0
        %v2075 = vmul.f32 %v2067, %v1654
        %v2076 = vmul.f32 %v2069, %v1655
        %v2077 = vmul.f32 %v2071, %v1654
        %v2078 = vmul.f32 %v2073, %v1655
        %s2079 = scalar_lea.vmem [#allocation11], 32
        %v2080 = vld [vmem:[%s2079] sm:$0xff]
        %v2081 = vld [vmem:[%s2079 + $0x8] sm:$0xff]
        %v2082 = vld [vmem:[%s2079 + $0x10] sm:$0xff]
        %v2083 = vld [vmem:[%s2079 + $0x18] sm:$0xff]
        %v2085 = vsel %vm1658, %v2080, 0
        %v2088 = vsel %vm1658, %v2081, 0
        %v2091 = vsel %vm1658, %v2082, 0
        %v2094 = vsel %vm1658, %v2083, 0
        %2096 = vmatprep.subr.mxu0 %v2018
        %2097 = vmatpush1.msra.mxu0 %v2016
        %2098 = vmatprep.subr.mxu0 %v2024
        %2099 = vmatpush1.msra.mxu0 %v2022
        %2100 = vmatprep.subr.mxu0 %v2076
        %2101 = vmatpush1.msra.mxu0 %v2075
        %2102 = vmatprep.subr.mxu0 %v2078
        %2103 = vmatpush1.msra.mxu0 %v2077
        %2104 = vmatprep.subr.mxu0 0.0
        %2105 = vmatpush1.msra.mxu0 0.0
        %2106 = vmatprep.subr.mxu0 0.0
        %2107 = vmatpush1.msra.mxu0 0.0
        %2108 = vmatprep.subr.mxu0 0.0
        %2109 = vmatpush1.msra.mxu0 0.0
        %2110 = vmatprep.subr.mxu0 0.0
        %2111 = vmatpush1.msra.mxu0 0.0
        %2112 = vmatprep.subr.mxu0 0.0
        %2113 = vmatpush1.msra.mxu0 0.0
        %2114 = vmatprep.subr.mxu0 0.0
        %2115 = vmatpush1.msra.mxu0 0.0
        %2116 = vmatprep.subr.mxu0 0.0
        %2117 = vmatpush1.msra.mxu0 0.0
        %2118 = vmatprep.subr.mxu0 0.0
        %2119 = vmatpush1.msra.mxu0 0.0
        %2120 = vmatprep.subr.mxu0 0.0
        %2121 = vmatpush1.msra.mxu0 0.0
        %2122 = vmatprep.subr.mxu0 0.0
        %2123 = vmatpush1.msra.mxu0 0.0
        %2124 = vmatprep.subr.mxu0 0.0
        %2125 = vmatpush1.msra.mxu0 0.0
        %2126 = vmatprep.subr.mxu0 0.0
        %2127 = vmatpush1.msra.mxu0 0.0
        %2128 = vmatprep.subr.mxu0 0.0
        %2129 = vmatpush1.msra.mxu0 0.0
        %2130 = vmatprep.subr.mxu0 0.0
        %2131 = vmatpush1.msra.mxu0 0.0
        %2132 = vmatprep.subr.mxu0 0.0
        %2133 = vmatpush1.msra.mxu0 0.0
        %2134 = vmatprep.subr.mxu0 0.0
        %2135 = vmatpush1.msra.mxu0 0.0
        %2136 = vmatprep.subr.mxu0 0.0
        %2137 = vmatpush1.msra.mxu0 0.0
        %2138 = vmatprep.subr.mxu0 0.0
        %2139 = vmatpush1.msra.mxu0 0.0
        %2140 = vmatprep.subr.mxu0 0.0
        %2141 = vmatpush1.msra.mxu0 0.0
        %2142 = vmatprep.subr.mxu0 0.0
        %2143 = vmatpush1.msra.mxu0 0.0
        %2144 = vmatprep.subr.mxu0 0.0
        %2145 = vmatpush1.msra.mxu0 0.0
        %2146 = vmatprep.subr.mxu0 0.0
        %2147 = vmatpush1.msra.mxu0 0.0
        %2148 = vmatprep.subr.mxu0 0.0
        %2149 = vmatpush1.msra.mxu0 0.0
        %2150 = vmatprep.subr.mxu0 0.0
        %2151 = vmatpush1.msra.mxu0 0.0
        %2152 = vmatprep.subr.mxu0 0.0
        %2153 = vmatpush1.msra.mxu0 0.0
        %2154 = vmatprep.subr.mxu0 0.0
        %2155 = vmatpush1.msra.mxu0 0.0
        %2156 = vmatprep.subr.mxu0 0.0
        %2157 = vmatpush1.msra.mxu0 0.0
        %2158 = vmatprep.subr.mxu0 0.0
        %2159 = vmatpush1.msra.mxu0 0.0
        %2160 = vmatprep.mubr.f32.mxu0 0.0
        %2161 = vmatmul.mubr.f32.gmra.mrb[0].mxu0 %v2085
        %v2162 = vpop.f32.mrb[0].mxu0
        %v2163 = vadd.f32 0.0, %v2162
        %v2164 = vpop.f32.mrb[0].mxu0
        %v2165 = vadd.f32 0.0, %v2164
        %2166 = vmatprep.mubr.f32.mxu0 0.0
        %2167 = vmatmul.mubr.f32.gmra.mrb[0].mxu0 %v2088
        %v2168 = vpop.f32.mrb[0].mxu0
        %v2169 = vadd.f32 0.0, %v2168
        %v2170 = vpop.f32.mrb[0].mxu0
        %v2171 = vadd.f32 0.0, %v2170
        %2172 = vmatprep.mubr.f32.mxu0 0.0
        %2173 = vmatmul.mubr.f32.gmra.mrb[0].mxu0 %v2091
        %v2174 = vpop.f32.mrb[0].mxu0
        %v2175 = vadd.f32 0.0, %v2174
        %v2176 = vpop.f32.mrb[0].mxu0
        %v2177 = vadd.f32 0.0, %v2176
        %2178 = vmatprep.mubr.f32.mxu0 0.0
        %2179 = vmatmul.mubr.f32.gmra.mrb[0].mxu0 %v2094
        %v2180 = vpop.f32.mrb[0].mxu0
        %v2181 = vadd.f32 0.0, %v2180
        %v2182 = vpop.f32.mrb[0].mxu0
        %v2183 = vadd.f32 0.0, %v2182
        %2184 = vdwg.mxu0
        %v2185 = vadd.f32 %v1932, %v2163
        %v2186 = vadd.f32 %v1933, %v2165
        %v2187 = vadd.f32 %v1934, %v2169
        %v2188 = vadd.f32 %v1935, %v2171
        %v2189 = vadd.f32 %v1936, %v2175
        %v2190 = vadd.f32 %v1937, %v2177
        %v2191 = vadd.f32 %v1938, %v2181
        %v2192 = vadd.f32 %v1939, %v2183
        %2193 = vst [vmem:[%s296] sm:$0xff] %v2185
        %2194 = vst [vmem:[%s296 + $0x8] sm:$0xff] %v2186
        %2195 = vst [vmem:[%s296 + $0x10] sm:$0xff] %v2187
        %2196 = vst [vmem:[%s296 + $0x18] sm:$0xff] %v2188
        %2197 = vst [vmem:[%s296 + $0x20] sm:$0xff] %v2189
        %2198 = vst [vmem:[%s296 + $0x28] sm:$0xff] %v2190
        %2199 = vst [vmem:[%s296 + $0x30] sm:$0xff] %v2191
        %2200 = vst [vmem:[%s296 + $0x38] sm:$0xff] %v2192
        %s2201 = sand.u32 %s142, 1
        %s2202 = scalar_lea.sflag [#allocation5], %s2201
        %s2203 = sand.u32 %s142, 1
        %s2204 = smul.addr %s2203, 64
        %s2205 = scalar_lea.vmem [#allocation12], %s2204
        // Predicated region
        $region61: #{tpu_custom_call.1} parent=39 // pred_check
          %p2206 = pneg %p152
        $region62: #{tpu_custom_call.1} parent=39 // pred_check_branch
          %2208 = sbr.rel (%p2206) target = $region64
        $region63: #{tpu_custom_call.1} parent=39 // pred_region
          %s2210 = ssub.s32 1024, 1024
          %2211 = vsyncadd %s2202, %s2210
          %s2212 = smul.addr %s24, 8
          %s2213 = smul.addr %s2212, 128
          %s2214 = scalar_lea.hbm %s5, %s2213
          %s2215 = sshll.u32 %s2205, 4
          %s2216 = int_to_ptr.vmem [resolvable:$true] %s2215
          %2221 = dma.vmem_to_hbm [thread:$0]  %s2216, 1024, %s2214, %s2202, 256, 256, 16
        $region64: #{tpu_custom_call.1} parent=39 // pred_fallthru
          _
      $region40: #{tpu_custom_call.1} parent=5 // pred_fallthru
        _
      %p2222 = scmp.le.s32.totalorder 2, %s19
      // Predicated region
      $region65: #{tpu_custom_call.1} parent=5 // pred_check
        %p2223 = pneg %p2222
      $region66: #{tpu_custom_call.1} parent=5 // pred_check_branch
        %2225 = sbr.rel (%p2223) target = $region68
      $region67: #{tpu_custom_call.1} parent=5 // pred_region
        %s2226 = ssub.s32 %s19, 2
        // Predicated region
        $region69: #{tpu_custom_call.1} parent=67 // pred_check
          %p2227 = pneg %p158
        $region70: #{tpu_custom_call.1} parent=67 // pred_check_branch
          %2229 = sbr.rel (%p2227) target = $region72
        $region71: #{tpu_custom_call.1} parent=67 // pred_region
          %s2230 = sand.u32 %s143, 1
          %s2231 = scalar_lea.sflag [#allocation5], %s2230
          %s2232 = sand.u32 %s143, 1
          %s2233 = smul.addr %s2232, 64
          %s2234 = scalar_lea.vmem [#allocation12], %s2233
          %2235 = dma.done %s2231, 1024
        $region72: #{tpu_custom_call.1} parent=67 // pred_fallthru
          _
      $region68: #{tpu_custom_call.1} parent=5 // pred_fallthru
        _
    $region6: #{tpu_custom_call.1} parent=1 // loop_footer
      %s23 = sadd.s32 1, %s19
    $region7: #{tpu_custom_call.1} parent=1 // loop_footer_branch
      %18 = sbr.rel target = $region3
    $region8: #{tpu_custom_call.1} parent=1 // loop_exit
      _
    %2236 = vsyncpa [#allocation4], 1
    %s2237 = scalar_lea.sflag [#allocation4], 1
    %2238 = vsyncpa %s2237, 1
    %2239 = vsyncpa [#allocation7], 1
    %2240 = vsyncpa [#allocation10], 1
    %2241 = vsyncpa [#allocation5], 1
    %s2242 = scalar_lea.sflag [#allocation5], 1
    %2243 = vsyncpa %s2242, 1

</llo_original>
